<compile_context>
chip_gen: v7x
topology: tpu7x:2x2x1
jax: 0.10.0
libtpu: 0.0.40
codegen_flags: <defaults>
</compile_context>

<pallas_src>
import functools
import math

import jax
import jax.numpy as jnp
from jax.experimental import pallas as pl
from jax.experimental.pallas import tpu as pltpu


def round_up(x, m):
    return ((x + m - 1) // m) * m


def _default_vmem_limit():
    # v7x has 64 MiB/TC; v5e/v6e have 128 MiB. Use 3/4 of capacity, capped at 96 MiB.
    try:
        cap = int(pltpu.get_tpu_info().vmem_capacity_bytes)
        return max(32 * 1024 * 1024, min((cap * 3) // 4, 96 * 1024 * 1024))
    except Exception:
        return 48 * 1024 * 1024


VMEM_LIMIT = _default_vmem_limit()


# ----------------------------------------------------------------------------
# Tile-size selection (M/N/K padded so the grid divides evenly; N lane-dense)
# ----------------------------------------------------------------------------

def _choose_m(m):
    if m <= 512:
        mp = round_up(m, 16)
        return mp, mp
    mp = round_up(m, 128)
    for tm in (512, 256, 128):
        if mp % tm == 0:
            return mp, tm
    return mp, 128


def _choose_n(n):
    np_ = round_up(n, 128)
    if np_ <= 512:
        return np_, np_
    for tn in (512, 256, 128):
        if np_ % tn == 0:
            return np_, tn
    return np_, 128


def _choose_k(k):
    kp = round_up(k, 128)
    if kp <= 1024:
        return kp, kp
    for tk in (512, 256, 128):
        if kp % tk == 0:
            return kp, tk
    return kp, 128


# ----------------------------------------------------------------------------
# Pallas kernels
# ----------------------------------------------------------------------------

def _matmul_kernel(*refs, relu, has_residual):
    """bf16 matmul with f32 VMEM accumulator; fused scale/shift(+residual)(+ReLU) epilogue."""
    if has_residual:
        a_ref, b_ref, s_ref, c_ref, r_ref, o_ref, acc_ref = refs
    else:
        a_ref, b_ref, s_ref, c_ref, o_ref, acc_ref = refs
        r_ref = None

    @pl.when(pl.program_id(2) == 0)
    def _():
        acc_ref[...] = jnp.zeros_like(acc_ref)

    acc_ref[...] += jnp.dot(a_ref[...], b_ref[...],
                            preferred_element_type=jnp.float32)

    @pl.when(pl.program_id(2) == pl.num_programs(2) - 1)
    def _():
        acc = acc_ref[...] * s_ref[...] + c_ref[...]
        if r_ref is not None:
            acc = acc + r_ref[...].astype(jnp.float32)
        if relu:
            acc = jnp.maximum(acc, 0.0)
        o_ref[...] = acc.astype(o_ref.dtype)


def matmul_scale_bias(a, b, scale, shift, residual=None, relu=False,
                      out_dtype=jnp.bfloat16):
    """out = (a @ b) * scale + shift (+ residual) (+ ReLU); scale/shift per column."""
    M, K = a.shape
    K2, N = b.shape
    assert K == K2
    Mp, tm = _choose_m(M)
    Np, tn = _choose_n(N)
    Kp, tk = _choose_k(K)

    a_p = jnp.pad(a.astype(jnp.bfloat16), ((0, Mp - M), (0, Kp - K)))
    b_p = jnp.pad(b.astype(jnp.bfloat16), ((0, Kp - K), (0, Np - N)))
    s_p = jnp.pad(scale.reshape(1, N).astype(jnp.float32), ((0, 0), (0, Np - N)))
    c_p = jnp.pad(shift.reshape(1, N).astype(jnp.float32), ((0, 0), (0, Np - N)))

    inputs = [a_p, b_p, s_p, c_p]
    in_specs = [
        pl.BlockSpec((tm, tk), lambda i, j, k: (i, k)),
        pl.BlockSpec((tk, tn), lambda i, j, k: (k, j)),
        pl.BlockSpec((1, tn), lambda i, j, k: (0, j)),
        pl.BlockSpec((1, tn), lambda i, j, k: (0, j)),
    ]
    has_residual = residual is not None
    if has_residual:
        r_p = jnp.pad(residual.astype(jnp.bfloat16), ((0, Mp - M), (0, Np - N)))
        inputs.append(r_p)
        in_specs.append(pl.BlockSpec((tm, tn), lambda i, j, k: (i, j)))

    out = pl.pallas_call(
        functools.partial(_matmul_kernel, relu=relu, has_residual=has_residual),
        out_shape=jax.ShapeDtypeStruct((Mp, Np), out_dtype),
        grid=(Mp // tm, Np // tn, Kp // tk),
        in_specs=in_specs,
        out_specs=pl.BlockSpec((tm, tn), lambda i, j, k: (i, j)),
        scratch_shapes=[pltpu.VMEM((tm, tn), jnp.float32)],
        compiler_params=pltpu.CompilerParams(
            dimension_semantics=("parallel", "parallel", "arbitrary"),
            vmem_limit_bytes=VMEM_LIMIT),
    )(*inputs)
    return out[:M, :N]


def _maxpool3_s1_kernel(x_ref, o_ref):
    """Separable 3x3 stride-1 max over one padded image; wrapper decimates by 2."""
    xp = x_ref[0].astype(jnp.float32)          # (H+2, W+2, C)
    H = xp.shape[0] - 2
    W = xp.shape[1] - 2
    v = jnp.maximum(jnp.maximum(xp[0:H, :, :], xp[1:H + 1, :, :]), xp[2:H + 2, :, :])
    m = jnp.maximum(jnp.maximum(v[:, 0:W, :], v[:, 1:W + 1, :]), v[:, 2:W + 2, :])
    o_ref[0] = m.astype(o_ref.dtype)


def _avgpool_kernel(x_ref, o_ref, *, inv_hw):
    o_ref[0, 0] = jnp.sum(x_ref[0].astype(jnp.float32), axis=0) * inv_hw


def _lstm_step_kernel(gx_ref, whh_ref, o_ref, h_ref, c_ref, *, hidden):
    t = pl.program_id(0)

    @pl.when(t == 0)
    def _():
        h_ref[...] = jnp.zeros_like(h_ref)
        c_ref[...] = jnp.zeros_like(c_ref)

    gates = gx_ref[...] + jnp.dot(h_ref[...].astype(jnp.bfloat16), whh_ref[...],
                                  preferred_element_type=jnp.float32)
    i = jax.nn.sigmoid(gates[:, 0 * hidden:1 * hidden])
    f = jax.nn.sigmoid(gates[:, 1 * hidden:2 * hidden])
    g = jnp.tanh(gates[:, 2 * hidden:3 * hidden])
    o = jax.nn.sigmoid(gates[:, 3 * hidden:4 * hidden])
    c_new = f * c_ref[...] + i * g
    h_new = o * jnp.tanh(c_new)
    c_ref[...] = c_new
    h_ref[...] = h_new

    @pl.when(t == pl.num_programs(0) - 1)
    def _():
        o_ref[...] = h_new        # only the last timestep is written back to HBM


def _fc_head_kernel(x_ref, w1_ref, b1_ref, g1_ref, bb1_ref,
                    w2_ref, b2_ref, g2_ref, bb2_ref,
                    w3_ref, b3_ref, o_ref):
    def layernorm(v, g, b):
        mu = jnp.mean(v, axis=-1, keepdims=True)
        var = jnp.mean((v - mu) ** 2, axis=-1, keepdims=True)
        return (v - mu) * jax.lax.rsqrt(var + 1e-5) * g + b

    h = jnp.dot(x_ref[...].astype(jnp.bfloat16), w1_ref[...],
                preferred_element_type=jnp.float32) + b1_ref[...]
    h = jnp.maximum(layernorm(h, g1_ref[...], bb1_ref[...]), 0.0)
    # Dropout(0.3): identity in eval mode.
    h = jnp.dot(h.astype(jnp.bfloat16), w2_ref[...],
                preferred_element_type=jnp.float32) + b2_ref[...]
    h = jnp.maximum(layernorm(h, g2_ref[...], bb2_ref[...]), 0.0)
    # Dropout(0.3): identity in eval mode.
    o_ref[...] = jnp.dot(h.astype(jnp.bfloat16), w3_ref[...],
                         preferred_element_type=jnp.float32) + b3_ref[...]


# ----------------------------------------------------------------------------
# Wrappers (glue: im2col, padding, reshapes)
# ----------------------------------------------------------------------------

def conv2d_bn(x, w, scale, shift, stride, padding, relu, residual=None):
    """x: (N,H,W,C) NHWC bf16; w: (kh,kw,Cin,Cout) bf16; eval BN folded into scale/shift.
    Optional fused residual add (same output shape) + ReLU in the matmul epilogue."""
    N, H, W, C = x.shape
    kh, kw, _, O = w.shape
    OH = (H + 2 * padding - kh) // stride + 1
    OW = (W + 2 * padding - kw) // stride + 1
    if kh == 1 and kw == 1 and padding == 0:
        xs = x[:, ::stride, ::stride, :] if stride > 1 else x
        patches = xs.reshape(N * OH * OW, C)
    else:
        xp = jnp.pad(x, ((0, 0), (padding, padding), (padding, padding), (0, 0)))
        cols = []
        for i in range(kh):
            for j in range(kw):
                cols.append(jax.lax.slice(
                    xp, (0, i, j, 0),
                    (N, i + (OH - 1) * stride + 1, j + (OW - 1) * stride + 1, C),
                    (1, stride, stride, 1)))
        patches = jnp.stack(cols, axis=3).reshape(N * OH * OW, kh * kw * C)
    res2 = residual.reshape(N * OH * OW, O) if residual is not None else None
    out = matmul_scale_bias(patches, w.reshape(kh * kw * C, O), scale, shift,
                            residual=res2, relu=relu, out_dtype=jnp.bfloat16)
    return out.reshape(N, OH, OW, O)


def maxpool_3x3_s2_p1(x):
    N, H, W, C = x.shape
    xp = jnp.pad(x, ((0, 0), (1, 1), (1, 1), (0, 0)), constant_values=-jnp.inf)
    dense = pl.pallas_call(
        _maxpool3_s1_kernel,
        out_shape=jax.ShapeDtypeStruct((N, H, W, C), x.dtype),
        grid=(N,),
        in_specs=[pl.BlockSpec((1, H + 2, W + 2, C), lambda n: (n, 0, 0, 0))],
        out_specs=pl.BlockSpec((1, H, W, C), lambda n: (n, 0, 0, 0)),
        compiler_params=pltpu.CompilerParams(
            dimension_semantics=("parallel",), vmem_limit_bytes=VMEM_LIMIT),
    )(xp)
    # Decimate the stride-1 max by 2 -> exactly MaxPool2d(kernel=3, stride=2, pad=1).
    return dense[:, ::2, ::2, :]


def global_avg_pool(x):
    """AdaptiveAvgPool2d((1,1)) -> (N, C) in f32."""
    N, H, W, C = x.shape
    hw = H * W
    x3 = x.reshape(N, hw, C)
    out = pl.pallas_call(
        functools.partial(_avgpool_kernel, inv_hw=1.0 / hw),
        out_shape=jax.ShapeDtypeStruct((N, 1, C), jnp.float32),
        grid=(N,),
        in_specs=[pl.BlockSpec((1, hw, C), lambda n: (n, 0, 0))],
        out_specs=pl.BlockSpec((1, 1, C), lambda n: (n, 0, 0)),
        compiler_params=pltpu.CompilerParams(
            dimension_semantics=("parallel",), vmem_limit_bytes=VMEM_LIMIT),
    )(x3)
    return out.reshape(N, C)


def bottleneck_forward(x, blk):
    s = blk['stride']
    w, sc, sh = blk['c1']
    out = conv2d_bn(x, w, sc, sh, stride=1, padding=0, relu=True)
    w, sc, sh = blk['c2']
    out = conv2d_bn(out, w, sc, sh, stride=s, padding=1, relu=True)
    if 'down' in blk:
        w, sc, sh = blk['down']
        identity = conv2d_bn(x, w, sc, sh, stride=s, padding=0, relu=False)
    else:
        identity = x
    # Residual add + ReLU fused into the c3 matmul epilogue.
    w, sc, sh = blk['c3']
    return conv2d_bn(out, w, sc, sh, stride=1, padding=0, relu=True, residual=identity)


def resnet50_forward(x, p):
    w, sc, sh = p['stem']
    x = conv2d_bn(x, w, sc, sh, stride=2, padding=3, relu=True)
    x = maxpool_3x3_s2_p1(x)
    for blk in p['blocks']:
        x = bottleneck_forward(x, blk)
    return global_avg_pool(x)  # (N, 2048) f32


def lstm_last_hidden(feats, p):
    """Single-layer batch_first LSTM; returns h at the last timestep (== out[:, -1, :])."""
    B, S, D = feats.shape
    H = p['hidden']
    # Input-to-hidden part for all timesteps in one tiled bf16 matmul (f32 output).
    gx = matmul_scale_bias(feats.reshape(B * S, D), p['w_ih_t'],
                           jnp.ones((4 * H,), jnp.float32),
                           p['b_ih'] + p['b_hh'], relu=False,
                           out_dtype=jnp.float32)
    gx = jnp.transpose(gx.reshape(B, S, 4 * H), (1, 0, 2))  # time-major (S, B, 4H)
    out = pl.pallas_call(
        functools.partial(_lstm_step_kernel, hidden=H),
        out_shape=jax.ShapeDtypeStruct((B, H), jnp.float32),
        grid=(S,),
        in_specs=[
            pl.BlockSpec((None, B, 4 * H), lambda t: (t, 0, 0)),
            pl.BlockSpec((H, 4 * H), lambda t: (0, 0)),
        ],
        out_specs=pl.BlockSpec((B, H), lambda t: (0, 0)),
        scratch_shapes=[pltpu.VMEM((B, H), jnp.float32),
                        pltpu.VMEM((B, H), jnp.float32)],
        compiler_params=pltpu.CompilerParams(
            dimension_semantics=("arbitrary",),
            vmem_limit_bytes=VMEM_LIMIT),
    )(gx, p['w_hh_t'])
    return out


def fc_head(x, p):
    B = x.shape[0]
    num_classes = p['w3'].shape[1]
    return pl.pallas_call(
        _fc_head_kernel,
        out_shape=jax.ShapeDtypeStruct((B, num_classes), jnp.float32),
    )(x, p['w1'], p['b1'], p['g1'], p['bb1'],
      p['w2'], p['b2'], p['g2'], p['bb2'],
      p['w3'], p['b3'])


def group_activity_classifier_forward(x, params):
    batch, seq, c, h, w = x.shape
    imgs = jnp.transpose(x.reshape(batch * seq, c, h, w), (0, 2, 3, 1))  # NCHW -> NHWC
    imgs = imgs.astype(jnp.bfloat16)
    feats = resnet50_forward(imgs, params['resnet'])                      # (B*S, 2048) f32
    feats = feats.reshape(batch, seq, 2048)
    h_last = lstm_last_hidden(feats, params['lstm'])                      # (B, 512) f32
    return fc_head(h_last, params['fc'])                                  # (B, 8) f32


# ----------------------------------------------------------------------------
# Deterministic synthetic parameters (weights pre-cast to bf16, BN folded in f32)
# ----------------------------------------------------------------------------

class KeyGen:
    def __init__(self, seed=0):
        self._key = jax.random.PRNGKey(seed)
        self._count = 0

    def __call__(self):
        self._count += 1
        return jax.random.fold_in(self._key, self._count)


def conv_bn_params(kg, k, cin, cout):
    w = jax.random.normal(kg(), (k, k, cin, cout), jnp.float32) * math.sqrt(2.0 / (k * k * cin))
    gamma = 1.0 + 0.05 * jax.random.normal(kg(), (cout,), jnp.float32)
    beta = 0.05 * jax.random.normal(kg(), (cout,), jnp.float32)
    mean = 0.05 * jax.random.normal(kg(), (cout,), jnp.float32)
    var = 1.0 + 0.05 * jax.random.uniform(kg(), (cout,), jnp.float32)
    scale = gamma * jax.lax.rsqrt(var + 1e-5)
    shift = beta - mean * scale
    return w.astype(jnp.bfloat16), scale, shift


def make_resnet50_params(kg):
    p = {'stem': conv_bn_params(kg, 7, 3, 64)}
    blocks = []
    in_ch = 64
    for n_blocks, planes, stride in [(3, 64, 1), (4, 128, 2), (6, 256, 2), (3, 512, 2)]:
        for b in range(n_blocks):
            s = stride if b == 0 else 1
            blk = {'stride': s,
                   'c1': conv_bn_params(kg, 1, in_ch, planes),
                   'c2': conv_bn_params(kg, 3, planes, planes),
                   'c3': conv_bn_params(kg, 1, planes, planes * 4)}
            if s != 1 or in_ch != planes * 4:
                blk['down'] = conv_bn_params(kg, 1, in_ch, planes * 4)
            blocks.append(blk)
            in_ch = planes * 4
    p['blocks'] = blocks
    return p


def make_lstm_params(kg, input_size=2048, hidden=512):
    k = 1.0 / math.sqrt(hidden)
    u = lambda shape: jax.random.uniform(kg(), shape, jnp.float32, -k, k)
    return {'hidden': hidden,
            'w_ih_t': u((input_size, 4 * hidden)).astype(jnp.bfloat16),
            'w_hh_t': u((hidden, 4 * hidden)).astype(jnp.bfloat16),
            'b_ih': u((4 * hidden,)),
            'b_hh': u((4 * hidden,))}


def make_fc_params(kg, hidden=512, num_classes=8):
    def lin(cin, cout):
        k = 1.0 / math.sqrt(cin)
        w = jax.random.uniform(kg(), (cin, cout), jnp.float32, -k, k)
        b = jax.random.uniform(kg(), (1, cout), jnp.float32, -k, k)
        return w.astype(jnp.bfloat16), b

    w1, b1 = lin(hidden, 256)
    w2, b2 = lin(256, 128)
    w3, b3 = lin(128, num_classes)
    return {'w1': w1, 'b1': b1,
            'g1': jnp.ones((1, 256), jnp.float32), 'bb1': jnp.zeros((1, 256), jnp.float32),
            'w2': w2, 'b2': b2,
            'g2': jnp.ones((1, 128), jnp.float32), 'bb2': jnp.zeros((1, 128), jnp.float32),
            'w3': w3, 'b3': b3}


if __name__ == "__main__":
    kg = KeyGen(0)
    params = {'resnet': make_resnet50_params(kg),
              'lstm': make_lstm_params(kg),
              'fc': make_fc_params(kg)}

    batch, seq, c, h, w = 2, 3, 3, 64, 64
    x = jax.random.normal(jax.random.PRNGKey(0), (batch, seq, c, h, w), jnp.float32)

    logits = group_activity_classifier_forward(x, params)
    logits = jax.block_until_ready(logits)
    assert logits.shape == (batch, 8), logits.shape
    print("KERNEL_OK")
</pallas_src>

<mosaic_0001>
module attributes {stable_mosaic.version = 11 : i64} {
  func.func @_matmul_kernel(%arg0: i32, %arg1: i32, %arg2: i32, %arg3: memref<512x256xbf16, #tpu.memory_space<vmem>>, %arg4: memref<256x128xbf16, #tpu.memory_space<vmem>>, %arg5: memref<1x128xf32, #tpu.memory_space<vmem>>, %arg6: memref<1x128xf32, #tpu.memory_space<vmem>>, %arg7: memref<512x128xbf16, #tpu.memory_space<vmem>>, %arg8: memref<512x128xf32, #tpu.memory_space<vmem>>) attributes {dimension_semantics = [#tpu.dimension_semantics<parallel>, #tpu.dimension_semantics<parallel>, #tpu.dimension_semantics<arbitrary>], iteration_bounds = array<i64: 12, 1, 1>, scalar_prefetch = 0 : i64, scratch_operands = 1 : i64, tpu.core_type = #tpu.core_type<tc>, window_params = [{transform_indices = @transform_0, window_bounds = array<i64: 512, 256>}, {transform_indices = @transform_1, window_bounds = array<i64: 256, 128>}, {transform_indices = @transform_2, window_bounds = array<i64: 1, 128>}, {transform_indices = @transform_3, window_bounds = array<i64: 1, 128>}, {transform_indices = @transform_4, window_bounds = array<i64: 512, 128>}]} {
    %c0_i32 = arith.constant 0 : i32
    %0 = arith.cmpi eq, %arg2, %c0_i32 : i32
    %1 = arith.extui %0 : i1 to i32
    %c0_i32_0 = arith.constant 0 : i32
    %2 = arith.cmpi ne, %1, %c0_i32_0 : i32
    scf.if %2 {
      %cst_10 = arith.constant 0.000000e+00 : f32
      %12 = vector.broadcast %cst_10 : f32 to vector<512x128xf32>
      %c0_11 = arith.constant 0 : index
      %c0_12 = arith.constant 0 : index
      %13 = vector.load %arg8[%c0_11, %c0_12] : memref<512x128xf32, #tpu.memory_space<vmem>>, vector<512x128xf32>
      tpu.vector_store %arg8[%c0_11, %c0_12], %12 {strides = array<i32>} : memref<512x128xf32, #tpu.memory_space<vmem>>, vector<512x128xf32>,
    } else {
    }
    %c0 = arith.constant 0 : index
    %c0_1 = arith.constant 0 : index
    %3 = vector.load %arg8[%c0, %c0_1] : memref<512x128xf32, #tpu.memory_space<vmem>>, vector<512x128xf32>
    %c0_2 = arith.constant 0 : index
    %c0_3 = arith.constant 0 : index
    %4 = vector.load %arg3[%c0_2, %c0_3] : memref<512x256xbf16, #tpu.memory_space<vmem>>, vector<512x256xbf16>
    %c0_4 = arith.constant 0 : index
    %c0_5 = arith.constant 0 : index
    %5 = vector.load %arg4[%c0_4, %c0_5] : memref<256x128xbf16, #tpu.memory_space<vmem>>, vector<256x128xbf16>
    %cst = arith.constant dense<0.000000e+00> : vector<512x128xf32>
    %6 = tpu.matmul %4, %5, %cst {dimension_numbers = #tpu.dot_dimension_numbers<[1], [0], [0], [1], [0, 0, 1, 1], [], []>} : vector<512x256xbf16>, vector<256x128xbf16>, vector<512x128xf32> -> vector<512x128xf32>
    %7 = arith.addf %3, %6 : vector<512x128xf32>
    %c0_6 = arith.constant 0 : index
    %c0_7 = arith.constant 0 : index
    %8 = vector.load %arg8[%c0_6, %c0_7] : memref<512x128xf32, #tpu.memory_space<vmem>>, vector<512x128xf32>
    tpu.vector_store %arg8[%c0_6, %c0_7], %7 {strides = array<i32>} : memref<512x128xf32, #tpu.memory_space<vmem>>, vector<512x128xf32>,
    %c0_i32_8 = arith.constant 0 : i32
    %9 = arith.cmpi eq, %arg2, %c0_i32_8 : i32
    %10 = arith.extui %9 : i1 to i32
    %c0_i32_9 = arith.constant 0 : i32
    %11 = arith.cmpi ne, %10, %c0_i32_9 : i32
    scf.if %11 {
      %c0_10 = arith.constant 0 : index
      %c0_11 = arith.constant 0 : index
      %12 = vector.load %arg8[%c0_10, %c0_11] : memref<512x128xf32, #tpu.memory_space<vmem>>, vector<512x128xf32>
      %c0_12 = arith.constant 0 : index
      %c0_13 = arith.constant 0 : index
      %13 = vector.load %arg5[%c0_12, %c0_13] : memref<1x128xf32, #tpu.memory_space<vmem>>, vector<1x128xf32>
      %14 = vector.broadcast %13 : vector<1x128xf32> to vector<512x128xf32>
      %15 = arith.mulf %12, %14 : vector<512x128xf32>
      %c0_14 = arith.constant 0 : index
      %c0_15 = arith.constant 0 : index
      %16 = vector.load %arg6[%c0_14, %c0_15] : memref<1x128xf32, #tpu.memory_space<vmem>>, vector<1x128xf32>
      %17 = vector.broadcast %16 : vector<1x128xf32> to vector<512x128xf32>
      %18 = arith.addf %15, %17 : vector<512x128xf32>
      %cst_16 = arith.constant 0.000000e+00 : f32
      %19 = vector.broadcast %cst_16 : f32 to vector<512x128xf32>
      %20 = arith.maximumf %18, %19 : vector<512x128xf32>
      %21 = arith.truncf %20 : vector<512x128xf32> to vector<512x128xbf16>
      %c0_17 = arith.constant 0 : index
      %c0_18 = arith.constant 0 : index
      %22 = vector.load %arg7[%c0_17, %c0_18] : memref<512x128xbf16, #tpu.memory_space<vmem>>, vector<512x128xbf16>
      tpu.vector_store %arg7[%c0_17, %c0_18], %21 {strides = array<i32>} : memref<512x128xbf16, #tpu.memory_space<vmem>>, vector<512x128xbf16>,
    } else {
    }
    return
  }
  func.func @transform_0(%arg0: i32, %arg1: i32, %arg2: i32) -> (i32, i32) {
    %c0_i32 = arith.constant 0 : i32
    return %arg0, %arg2 : i32, i32
  }
  func.func @transform_1(%arg0: i32, %arg1: i32, %arg2: i32) -> (i32, i32) {
    %c0_i32 = arith.constant 0 : i32
    return %arg2, %arg1 : i32, i32
  }
  func.func @transform_2(%arg0: i32, %arg1: i32, %arg2: i32) -> (i32, i32) {
    %c0_i32 = arith.constant 0 : i32
    %c0_i32_0 = arith.constant 0 : i32
    return %c0_i32, %arg1 : i32, i32
  }
  func.func @transform_3(%arg0: i32, %arg1: i32, %arg2: i32) -> (i32, i32) {
    %c0_i32 = arith.constant 0 : i32
    %c0_i32_0 = arith.constant 0 : i32
    return %c0_i32, %arg1 : i32, i32
  }
  func.func @transform_4(%arg0: i32, %arg1: i32, %arg2: i32) -> (i32, i32) {
    %c0_i32 = arith.constant 0 : i32
    return %arg0, %arg1 : i32, i32
  }
}

</mosaic_0001>

<llo_original>
// kernel: tpu_custom_call.1
$region0: #{tpu_custom_call.1}
  #allocation0 [shape = 'u32[]', space=smem, size = 0x4, offset = 0x4, fixed_abs, tag = 'smem constant byte address 0x4 - core index']
  #allocation1 [shape = 'u32[144,128]{1,0:T(1,128)}', space=vmem, size = 0x12000, scoped, tag = 'internal scratch']
  #allocation2 [shape = 'f32[512,128]{1,0:T(8,128)}', space=vmem, size = 0x40000, scoped, tag = 'scratch operand']
  %s0 = inlined_call_operand.hbm [shape: bf16[6144,256], index: 0, kind: input, shape index: {}]
  %s1 = inlined_call_operand.hbm [shape: bf16[256,128], index: 1, kind: input, shape index: {}]
  %s2 = inlined_call_operand.hbm [shape: f32[1,128], index: 2, kind: input, shape index: {}]
  %s3 = inlined_call_operand.hbm [shape: f32[1,128], index: 3, kind: input, shape index: {}]
  %s4 = inlined_call_operand.hbm [shape: bf16[6144,128], index: 4, kind: output, shape index: {}]
  %s5 = sld [smem:[#allocation0]]
  $region73: #{tpu_custom_call.1} parent=0
    _
  %s7 = ssub.s32 1, %s5
  %s8 = scalar_select 0, %s7, %s5
  $region1: #{tpu_custom_call.1} parent=0
    #allocation3 [shape = 'u8[524288]{0}', space=vmem, size = 0x80000, scoped, tag = 'input window, operand 0']
    #allocation4 [shape = 's32[2]{0}', space=sflag, size = 0x8, scoped, tag = 'scoped memory for tpu_custom_call.1']
    #allocation5 [shape = 's32[2]{0}', space=sflag, size = 0x8, scoped, tag = 'scoped memory for tpu_custom_call.1']
    #allocation6 [shape = 'u8[65536]{0}', space=vmem, size = 0x10000, scoped, tag = 'input window, operand 1, single buffered']
    #allocation7 [shape = 's32[1]{0}', space=sflag, size = 0x4, scoped, tag = 'scoped memory for tpu_custom_call.1']
    #allocation8 [shape = 'u8[512]{0}', space=vmem, size = 0x400, scoped, tag = 'input window, operand 2, single buffered']
    #allocation9 [shape = 'u8[512]{0}', space=vmem, size = 0x400, scoped, tag = 'input window, operand 3, single buffered']
    #allocation10 [shape = 's32[1]{0}', space=sflag, size = 0x4, scoped, tag = 'scoped memory for tpu_custom_call.1']
    #allocation11 [shape = 'u8[262144]{0}', space=vmem, size = 0x40000, scoped, tag = 'output window, operand 0']
    %9 = vsyncpa [#allocation4], 0
    %s10 = scalar_lea.sflag [#allocation4], 1
    %11 = vsyncpa %s10, 0
    %12 = vsyncpa [#allocation7], 0
    %13 = vsyncpa [#allocation10], 0
    %14 = vsyncpa [#allocation5], 0
    %s15 = scalar_lea.sflag [#allocation5], 1
    %16 = vsyncpa %s15, 0
    loop: start=0, step=1, limit=14
    $region2: #{tpu_custom_call.1} parent=1 // loop_pre_header
      _
    $region3: #{tpu_custom_call.1} parent=1 // loop_header
      %s18 = sphi 0, %s22
      %p19 = scmp.ge.s32.totalorder %s18, 14
      %s25 = sphi 0, %s44
      %s26 = sphi 0, %s40
      %s27 = sphi 0, %s36
      %s28 = sphi 0, %s25
      %s29 = sphi 0, %s26
      %s30 = sphi 0, %s27
      %s31 = sphi 0, %s28
      %s32 = sphi 0, %s29
      %s33 = sphi 0, %s30
      %s49 = sphi 0, %s51
      %s52 = sphi 0, %s49
      %s53 = sphi 0, %s52
      %s69 = sphi 0, %s53
      %s77 = sphi 0, %s79
      %s80 = sphi 0, %s77
      %s81 = sphi 0, %s80
      %s97 = sphi 0, %s81
      %s103 = sphi 0, %s105
      %s106 = sphi 0, %s103
      %s107 = sphi 0, %s106
      %s123 = sphi 0, %s107
      %s129 = sphi 0, %s131
      %s132 = sphi 0, %s129
      %s133 = sphi 0, %s132
      %s149 = sphi 0, %s133
      %s157 = sphi 0, %s159
      %s160 = sphi 0, %s157
      %s161 = sphi 0, %s160
      %s177 = sphi 0, %s161
    $region4: #{tpu_custom_call.1} parent=1 // loop_header_branch
      %21 = sbr.rel (%p19) target = $region8
    $region5: #{tpu_custom_call.1} parent=1 // loop_body
      %s23 = ssub.s32 %s18, 1
      %s24 = ssub.s32 %s18, 2
      %s34 = sadd.s32 1, %s27
      %p35 = scmp.ge.s32.totalorder %s34, 1
      %s36 = scalar_select %p35, 0, %s34
      %s37 = sadd.s32 1, %s26
      %s38 = scalar_select %p35, %s37, %s26
      %p39 = scmp.ge.s32.totalorder %s38, 1
      %s40 = scalar_select %p39, 0, %s38
      %s41 = sadd.s32 1, %s25
      %s42 = scalar_select %p39, %s41, %s25
      %p43 = scmp.ge.s32.totalorder %s42, 12
      %s44 = scalar_select %p43, 0, %s42
      %s45 = ssub.s32 %s25, %s44
      %s46 = ssub.s32 %s27, %s36
      %s47 = sor.u32 %s45, %s46
      %p48 = scmp.eq.s32.totalorder %s47, 0
      %s50 = sadd.s32 %s49, 1
      %s51 = scalar_select %p48, %s49, %s50
      %p54 = pneg %p48
      %p55 = scmp.eq.s32.totalorder %s18, 11
      %p56 = por %p54, %p55
      %p57 = scmp.ne.s32.totalorder %s49, %s52
      %p58 = scmp.eq.s32.totalorder %s18, 0
      %p59 = por %p57, %p58
      %p60 = scmp.ne.s32.totalorder %s49, %s52
      %p61 = scmp.eq.s32.totalorder %s23, 11
      %p62 = por %p60, %p61
      %p63 = scmp.ne.s32.totalorder %s52, %s53
      %p64 = scmp.eq.s32.totalorder %s23, 0
      %p65 = por %p63, %p64
      %p66 = scmp.ne.s32.totalorder %s52, %s53
      %p67 = scmp.eq.s32.totalorder %s24, 11
      %p68 = por %p66, %p67
      %p70 = scmp.ne.s32.totalorder %s53, %s69
      %p71 = scmp.eq.s32.totalorder %s24, 0
      %p72 = por %p70, %p71
      %s73 = ssub.s32 %s27, %s36
      %s74 = ssub.s32 %s26, %s40
      %s75 = sor.u32 %s73, %s74
      %p76 = scmp.eq.s32.totalorder %s75, 0
      %s78 = sadd.s32 %s77, 1
      %s79 = scalar_select %p76, %s77, %s78
      %p82 = pneg %p76
      %p83 = scmp.eq.s32.totalorder %s18, 11
      %p84 = por %p82, %p83
      %p85 = scmp.ne.s32.totalorder %s77, %s80
      %p86 = scmp.eq.s32.totalorder %s18, 0
      %p87 = por %p85, %p86
      %p88 = scmp.ne.s32.totalorder %s77, %s80
      %p89 = scmp.eq.s32.totalorder %s23, 11
      %p90 = por %p88, %p89
      %p91 = scmp.ne.s32.totalorder %s80, %s81
      %p92 = scmp.eq.s32.totalorder %s23, 0
      %p93 = por %p91, %p92
      %p94 = scmp.ne.s32.totalorder %s80, %s81
      %p95 = scmp.eq.s32.totalorder %s24, 11
      %p96 = por %p94, %p95
      %p98 = scmp.ne.s32.totalorder %s81, %s97
      %p99 = scmp.eq.s32.totalorder %s24, 0
      %p100 = por %p98, %p99
      %s101 = ssub.s32 %s26, %s40
      %p102 = scmp.eq.s32.totalorder %s101, 0
      %s104 = sadd.s32 %s103, 1
      %s105 = scalar_select %p102, %s103, %s104
      %p108 = pneg %p102
      %p109 = scmp.eq.s32.totalorder %s18, 11
      %p110 = por %p108, %p109
      %p111 = scmp.ne.s32.totalorder %s103, %s106
      %p112 = scmp.eq.s32.totalorder %s18, 0
      %p113 = por %p111, %p112
      %p114 = scmp.ne.s32.totalorder %s103, %s106
      %p115 = scmp.eq.s32.totalorder %s23, 11
      %p116 = por %p114, %p115
      %p117 = scmp.ne.s32.totalorder %s106, %s107
      %p118 = scmp.eq.s32.totalorder %s23, 0
      %p119 = por %p117, %p118
      %p120 = scmp.ne.s32.totalorder %s106, %s107
      %p121 = scmp.eq.s32.totalorder %s24, 11
      %p122 = por %p120, %p121
      %p124 = scmp.ne.s32.totalorder %s107, %s123
      %p125 = scmp.eq.s32.totalorder %s24, 0
      %p126 = por %p124, %p125
      %s127 = ssub.s32 %s26, %s40
      %p128 = scmp.eq.s32.totalorder %s127, 0
      %s130 = sadd.s32 %s129, 1
      %s131 = scalar_select %p128, %s129, %s130
      %p134 = pneg %p128
      %p135 = scmp.eq.s32.totalorder %s18, 11
      %p136 = por %p134, %p135
      %p137 = scmp.ne.s32.totalorder %s129, %s132
      %p138 = scmp.eq.s32.totalorder %s18, 0
      %p139 = por %p137, %p138
      %p140 = scmp.ne.s32.totalorder %s129, %s132
      %p141 = scmp.eq.s32.totalorder %s23, 11
      %p142 = por %p140, %p141
      %p143 = scmp.ne.s32.totalorder %s132, %s133
      %p144 = scmp.eq.s32.totalorder %s23, 0
      %p145 = por %p143, %p144
      %p146 = scmp.ne.s32.totalorder %s132, %s133
      %p147 = scmp.eq.s32.totalorder %s24, 11
      %p148 = por %p146, %p147
      %p150 = scmp.ne.s32.totalorder %s133, %s149
      %p151 = scmp.eq.s32.totalorder %s24, 0
      %p152 = por %p150, %p151
      %s153 = ssub.s32 %s25, %s44
      %s154 = ssub.s32 %s26, %s40
      %s155 = sor.u32 %s153, %s154
      %p156 = scmp.eq.s32.totalorder %s155, 0
      %s158 = sadd.s32 %s157, 1
      %s159 = scalar_select %p156, %s157, %s158
      %p162 = pneg %p156
      %p163 = scmp.eq.s32.totalorder %s18, 11
      %p164 = por %p162, %p163
      %p165 = scmp.ne.s32.totalorder %s157, %s160
      %p166 = scmp.eq.s32.totalorder %s18, 0
      %p167 = por %p165, %p166
      %p168 = scmp.ne.s32.totalorder %s157, %s160
      %p169 = scmp.eq.s32.totalorder %s23, 11
      %p170 = por %p168, %p169
      %p171 = scmp.ne.s32.totalorder %s160, %s161
      %p172 = scmp.eq.s32.totalorder %s23, 0
      %p173 = por %p171, %p172
      %p174 = scmp.ne.s32.totalorder %s160, %s161
      %p175 = scmp.eq.s32.totalorder %s24, 11
      %p176 = por %p174, %p175
      %p178 = scmp.ne.s32.totalorder %s161, %s177
      %p179 = scmp.eq.s32.totalorder %s24, 0
      %p180 = por %p178, %p179
      %p181 = scmp.le.s32.totalorder 1, %s18
      %p182 = scmp.lt.s32.totalorder %s18, 13
      %p183 = pnand %p181, %p182
      %p184 = pneg %p183
      // Predicated region
      $region9: #{tpu_custom_call.1} parent=5 // pred_check
        _
      $region10: #{tpu_custom_call.1} parent=5 // pred_check_branch
        %186 = sbr.rel (%p183) target = $region12
      $region11: #{tpu_custom_call.1} parent=5 // pred_region
        %s187 = ssub.s32 %s18, 1
        // Predicated region
        $region13: #{tpu_custom_call.1} parent=11 // pred_check
          %p188 = pneg %p93
        $region14: #{tpu_custom_call.1} parent=11 // pred_check_branch
          %190 = sbr.rel (%p188) target = $region16
        $region15: #{tpu_custom_call.1} parent=11 // pred_region
          %s191 = smul.u32 32, %s30
          %s193 = ssub.s32 2048, 2048
          %194 = vsyncadd [#allocation7], %s193
          %s195 = sadd.s32 %s29, %s191
          %s196 = smul.addr %s195, 64
          %s197 = scalar_lea.hbm %s1, %s196
          %s198 = sshll.u32 [#allocation6], 4
          %s199 = int_to_ptr.vmem [resolvable:$true] %s198
          %204 = dma.hbm_to_vmem [thread:$0]  %s197, 2048, %s199, [#allocation7], 64, 64, 4
        $region16: #{tpu_custom_call.1} parent=11 // pred_fallthru
          _
        // Predicated region
        $region17: #{tpu_custom_call.1} parent=11 // pred_check
          %p205 = pneg %p119
        $region18: #{tpu_custom_call.1} parent=11 // pred_check_branch
          %207 = sbr.rel (%p205) target = $region20
        $region19: #{tpu_custom_call.1} parent=11 // pred_region
          %s209 = ssub.s32 16, 16
          %210 = vsyncadd [#allocation7], %s209
          %s211 = smul.addr %s29, 16
          %s212 = scalar_lea.hbm %s2, %s211
          %s214 = sshll.u32 [#allocation8], 4
          %s215 = int_to_ptr.vmem [resolvable:$true] %s214
          %217 = dma.hbm_to_vmem [thread:$0]  %s212, 16, %s215, [#allocation7]
        $region20: #{tpu_custom_call.1} parent=11 // pred_fallthru
          _
        // Predicated region
        $region21: #{tpu_custom_call.1} parent=11 // pred_check
          %p218 = pneg %p145
        $region22: #{tpu_custom_call.1} parent=11 // pred_check_branch
          %220 = sbr.rel (%p218) target = $region24
        $region23: #{tpu_custom_call.1} parent=11 // pred_region
          %s222 = ssub.s32 16, 16
          %223 = vsyncadd [#allocation10], %s222
          %s224 = smul.addr %s29, 16
          %s225 = scalar_lea.hbm %s3, %s224
          %s227 = sshll.u32 [#allocation9], 4
          %s228 = int_to_ptr.vmem [resolvable:$true] %s227
          %230 = dma.hbm_to_vmem [thread:$0]  %s225, 16, %s228, [#allocation10]
        $region24: #{tpu_custom_call.1} parent=11 // pred_fallthru
          _
      $region12: #{tpu_custom_call.1} parent=5 // pred_fallthru
        _
      %p231 = scmp.lt.s32.totalorder %s18, 12
      // Predicated region
      $region25: #{tpu_custom_call.1} parent=5 // pred_check
        %p232 = pneg %p231
      $region26: #{tpu_custom_call.1} parent=5 // pred_check_branch
        %234 = sbr.rel (%p232) target = $region28
      $region27: #{tpu_custom_call.1} parent=5 // pred_region
        // Predicated region
        $region29: #{tpu_custom_call.1} parent=27 // pred_check
          %p235 = pneg %p59
        $region30: #{tpu_custom_call.1} parent=27 // pred_check_branch
          %237 = sbr.rel (%p235) target = $region32
        $region31: #{tpu_custom_call.1} parent=27 // pred_region
          %s238 = sand.u32 %s49, 1
          %s239 = scalar_lea.sflag [#allocation4], %s238
          %s240 = sand.u32 %s49, 1
          %s241 = smul.addr %s240, 512
          %s242 = scalar_lea.vmem [#allocation3], %s241
          %s243 = smul.u32 64, %s25
          %s244 = smul.u32 2, %s27
          %s246 = ssub.s32 8192, 8192
          %247 = vsyncadd %s239, %s246
          %s248 = smul.addr %s243, 2
          %s249 = sadd.s32 %s244, %s248
          %s250 = smul.addr %s249, 64
          %s251 = scalar_lea.hbm %s0, %s250
          %s252 = sshll.u32 %s242, 4
          %s253 = int_to_ptr.vmem [resolvable:$true] %s252
          %258 = dma.hbm_to_vmem [thread:$0]  %s251, 8192, %s253, %s239, 128, 128, 8
        $region32: #{tpu_custom_call.1} parent=27 // pred_fallthru
          _
      $region28: #{tpu_custom_call.1} parent=5 // pred_fallthru
        _
      %p259 = scmp.le.s32.totalorder 1, %s18
      %p260 = scmp.lt.s32.totalorder %s18, 13
      %p261 = pnand %p259, %p260
      %p262 = pneg %p261
      // Predicated region
      $region33: #{tpu_custom_call.1} parent=5 // pred_check
        _
      $region34: #{tpu_custom_call.1} parent=5 // pred_check_branch
        %264 = sbr.rel (%p261) target = $region36
      $region35: #{tpu_custom_call.1} parent=5 // pred_region
        %s265 = ssub.s32 %s18, 1
        %s266 = sand.u32 %s52, 1
        %s267 = scalar_lea.sflag [#allocation4], %s266
        %s268 = sand.u32 %s52, 1
        %s269 = smul.addr %s268, 512
        %s270 = scalar_lea.vmem [#allocation3], %s269
        // Predicated region
        $region37: #{tpu_custom_call.1} parent=35 // pred_check
          %p271 = pneg %p65
        $region38: #{tpu_custom_call.1} parent=35 // pred_check_branch
          %273 = sbr.rel (%p271) target = $region40
        $region39: #{tpu_custom_call.1} parent=35 // pred_region
          %274 = dma.done %s267, 8192
        $region40: #{tpu_custom_call.1} parent=35 // pred_fallthru
          _
        // Predicated region
        $region41: #{tpu_custom_call.1} parent=35 // pred_check
          %p275 = pneg %p93
        $region42: #{tpu_custom_call.1} parent=35 // pred_check_branch
          %277 = sbr.rel (%p275) target = $region44
        $region43: #{tpu_custom_call.1} parent=35 // pred_region
          %278 = dma.done [#allocation7], 2048
        $region44: #{tpu_custom_call.1} parent=35 // pred_fallthru
          _
        // Predicated region
        $region45: #{tpu_custom_call.1} parent=35 // pred_check
          %p279 = pneg %p119
        $region46: #{tpu_custom_call.1} parent=35 // pred_check_branch
          %281 = sbr.rel (%p279) target = $region48
        $region47: #{tpu_custom_call.1} parent=35 // pred_region
          %282 = dma.done [#allocation7], 16
        $region48: #{tpu_custom_call.1} parent=35 // pred_fallthru
          _
        // Predicated region
        $region49: #{tpu_custom_call.1} parent=35 // pred_check
          %p283 = pneg %p145
        $region50: #{tpu_custom_call.1} parent=35 // pred_check_branch
          %285 = sbr.rel (%p283) target = $region52
        $region51: #{tpu_custom_call.1} parent=35 // pred_region
          %286 = dma.done [#allocation10], 16
        $region52: #{tpu_custom_call.1} parent=35 // pred_fallthru
          _
        %s287 = sand.u32 %s52, 1
        %s288 = scalar_lea.sflag [#allocation4], %s287
        %s289 = sand.u32 %s52, 1
        %s290 = smul.addr %s289, 512
        %s291 = scalar_lea.vmem [#allocation3], %s290
        %p292 = pneg %p65
        %p293 = pneg %p62
        %p294 = pneg %p93
        %p295 = pneg %p90
        %p296 = pneg %p119
        %p297 = pneg %p116
        %p298 = pneg %p145
        %p299 = pneg %p142
        %p300 = pneg %p173
        %p301 = pneg %p170
        %s302 = sand.u32 %s160, 1
        %s303 = scalar_lea.sflag [#allocation5], %s302
        %s304 = sand.u32 %s160, 1
        %s305 = smul.addr %s304, 256
        %s306 = scalar_lea.vmem [#allocation11], %s305
        %s307 = smul.u32 64, %s28
        %s308 = smul.u32 2, %s30
        %s309 = smul.u32 32, %s30
        %s310 = smul.u32 64, %s28
        %p312 = scmp.eq.s32.totalorder %s30, 0
        // Predicated region
        $region53: #{tpu_custom_call.1} parent=35 // pred_check
          %p313 = pneg %p312
        $region54: #{tpu_custom_call.1} parent=35 // pred_check_branch
          %315 = sbr.rel (%p313) target = $region56
        $region55: #{tpu_custom_call.1} parent=35 // pred_region
          %316 = vst [vmem:[#allocation2] sm:$0xff] 0.0
          %317 = vst [vmem:[#allocation2 + $0x8] sm:$0xff] 0.0
          %318 = vst [vmem:[#allocation2 + $0x10] sm:$0xff] 0.0
          %319 = vst [vmem:[#allocation2 + $0x18] sm:$0xff] 0.0
          %320 = vst [vmem:[#allocation2 + $0x20] sm:$0xff] 0.0
          %321 = vst [vmem:[#allocation2 + $0x28] sm:$0xff] 0.0
          %322 = vst [vmem:[#allocation2 + $0x30] sm:$0xff] 0.0
          %323 = vst [vmem:[#allocation2 + $0x38] sm:$0xff] 0.0
          %324 = vst [vmem:[#allocation2 + $0x40] sm:$0xff] 0.0
          %325 = vst [vmem:[#allocation2 + $0x48] sm:$0xff] 0.0
          %326 = vst [vmem:[#allocation2 + $0x50] sm:$0xff] 0.0
          %327 = vst [vmem:[#allocation2 + $0x58] sm:$0xff] 0.0
          %328 = vst [vmem:[#allocation2 + $0x60] sm:$0xff] 0.0
          %329 = vst [vmem:[#allocation2 + $0x68] sm:$0xff] 0.0
          %330 = vst [vmem:[#allocation2 + $0x70] sm:$0xff] 0.0
          %331 = vst [vmem:[#allocation2 + $0x78] sm:$0xff] 0.0
          %332 = vst [vmem:[#allocation2 + $0x80] sm:$0xff] 0.0
          %333 = vst [vmem:[#allocation2 + $0x88] sm:$0xff] 0.0
          %334 = vst [vmem:[#allocation2 + $0x90] sm:$0xff] 0.0
          %335 = vst [vmem:[#allocation2 + $0x98] sm:$0xff] 0.0
          %336 = vst [vmem:[#allocation2 + $0xa0] sm:$0xff] 0.0
          %337 = vst [vmem:[#allocation2 + $0xa8] sm:$0xff] 0.0
          %338 = vst [vmem:[#allocation2 + $0xb0] sm:$0xff] 0.0
          %339 = vst [vmem:[#allocation2 + $0xb8] sm:$0xff] 0.0
          %340 = vst [vmem:[#allocation2 + $0xc0] sm:$0xff] 0.0
          %341 = vst [vmem:[#allocation2 + $0xc8] sm:$0xff] 0.0
          %342 = vst [vmem:[#allocation2 + $0xd0] sm:$0xff] 0.0
          %343 = vst [vmem:[#allocation2 + $0xd8] sm:$0xff] 0.0
          %344 = vst [vmem:[#allocation2 + $0xe0] sm:$0xff] 0.0
          %345 = vst [vmem:[#allocation2 + $0xe8] sm:$0xff] 0.0
          %346 = vst [vmem:[#allocation2 + $0xf0] sm:$0xff] 0.0
          %347 = vst [vmem:[#allocation2 + $0xf8] sm:$0xff] 0.0
          %348 = vst [vmem:[#allocation2 + $0x100] sm:$0xff] 0.0
          %349 = vst [vmem:[#allocation2 + $0x108] sm:$0xff] 0.0
          %350 = vst [vmem:[#allocation2 + $0x110] sm:$0xff] 0.0
          %351 = vst [vmem:[#allocation2 + $0x118] sm:$0xff] 0.0
          %352 = vst [vmem:[#allocation2 + $0x120] sm:$0xff] 0.0
          %353 = vst [vmem:[#allocation2 + $0x128] sm:$0xff] 0.0
          %354 = vst [vmem:[#allocation2 + $0x130] sm:$0xff] 0.0
          %355 = vst [vmem:[#allocation2 + $0x138] sm:$0xff] 0.0
          %356 = vst [vmem:[#allocation2 + $0x140] sm:$0xff] 0.0
          %357 = vst [vmem:[#allocation2 + $0x148] sm:$0xff] 0.0
          %358 = vst [vmem:[#allocation2 + $0x150] sm:$0xff] 0.0
          %359 = vst [vmem:[#allocation2 + $0x158] sm:$0xff] 0.0
          %360 = vst [vmem:[#allocation2 + $0x160] sm:$0xff] 0.0
          %361 = vst [vmem:[#allocation2 + $0x168] sm:$0xff] 0.0
          %362 = vst [vmem:[#allocation2 + $0x170] sm:$0xff] 0.0
          %363 = vst [vmem:[#allocation2 + $0x178] sm:$0xff] 0.0
          %364 = vst [vmem:[#allocation2 + $0x180] sm:$0xff] 0.0
          %365 = vst [vmem:[#allocation2 + $0x188] sm:$0xff] 0.0
          %366 = vst [vmem:[#allocation2 + $0x190] sm:$0xff] 0.0
          %367 = vst [vmem:[#allocation2 + $0x198] sm:$0xff] 0.0
          %368 = vst [vmem:[#allocation2 + $0x1a0] sm:$0xff] 0.0
          %369 = vst [vmem:[#allocation2 + $0x1a8] sm:$0xff] 0.0
          %370 = vst [vmem:[#allocation2 + $0x1b0] sm:$0xff] 0.0
          %371 = vst [vmem:[#allocation2 + $0x1b8] sm:$0xff] 0.0
          %372 = vst [vmem:[#allocation2 + $0x1c0] sm:$0xff] 0.0
          %373 = vst [vmem:[#allocation2 + $0x1c8] sm:$0xff] 0.0
          %374 = vst [vmem:[#allocation2 + $0x1d0] sm:$0xff] 0.0
          %375 = vst [vmem:[#allocation2 + $0x1d8] sm:$0xff] 0.0
          %376 = vst [vmem:[#allocation2 + $0x1e0] sm:$0xff] 0.0
          %377 = vst [vmem:[#allocation2 + $0x1e8] sm:$0xff] 0.0
          %378 = vst [vmem:[#allocation2 + $0x1f0] sm:$0xff] 0.0
          %379 = vst [vmem:[#allocation2 + $0x1f8] sm:$0xff] 0.0
        $region56: #{tpu_custom_call.1} parent=35 // pred_fallthru
          _
        %v380 = vld [vmem:[#allocation2] sm:$0xff]
        %v381 = vld [vmem:[#allocation2 + $0x8] sm:$0xff]
        %v382 = vld [vmem:[#allocation2 + $0x10] sm:$0xff]
        %v383 = vld [vmem:[#allocation2 + $0x18] sm:$0xff]
        %v384 = vld [vmem:[#allocation2 + $0x20] sm:$0xff]
        %v385 = vld [vmem:[#allocation2 + $0x28] sm:$0xff]
        %v386 = vld [vmem:[#allocation2 + $0x30] sm:$0xff]
        %v387 = vld [vmem:[#allocation2 + $0x38] sm:$0xff]
        %v388 = vld [vmem:[#allocation2 + $0x40] sm:$0xff]
        %v389 = vld [vmem:[#allocation2 + $0x48] sm:$0xff]
        %v390 = vld [vmem:[#allocation2 + $0x50] sm:$0xff]
        %v391 = vld [vmem:[#allocation2 + $0x58] sm:$0xff]
        %v392 = vld [vmem:[#allocation2 + $0x60] sm:$0xff]
        %v393 = vld [vmem:[#allocation2 + $0x68] sm:$0xff]
        %v394 = vld [vmem:[#allocation2 + $0x70] sm:$0xff]
        %v395 = vld [vmem:[#allocation2 + $0x78] sm:$0xff]
        %v396 = vld [vmem:[#allocation2 + $0x80] sm:$0xff]
        %v397 = vld [vmem:[#allocation2 + $0x88] sm:$0xff]
        %v398 = vld [vmem:[#allocation2 + $0x90] sm:$0xff]
        %v399 = vld [vmem:[#allocation2 + $0x98] sm:$0xff]
        %v400 = vld [vmem:[#allocation2 + $0xa0] sm:$0xff]
        %v401 = vld [vmem:[#allocation2 + $0xa8] sm:$0xff]
        %v402 = vld [vmem:[#allocation2 + $0xb0] sm:$0xff]
        %v403 = vld [vmem:[#allocation2 + $0xb8] sm:$0xff]
        %v404 = vld [vmem:[#allocation2 + $0xc0] sm:$0xff]
        %v405 = vld [vmem:[#allocation2 + $0xc8] sm:$0xff]
        %v406 = vld [vmem:[#allocation2 + $0xd0] sm:$0xff]
        %v407 = vld [vmem:[#allocation2 + $0xd8] sm:$0xff]
        %v408 = vld [vmem:[#allocation2 + $0xe0] sm:$0xff]
        %v409 = vld [vmem:[#allocation2 + $0xe8] sm:$0xff]
        %v410 = vld [vmem:[#allocation2 + $0xf0] sm:$0xff]
        %v411 = vld [vmem:[#allocation2 + $0xf8] sm:$0xff]
        %v412 = vld [vmem:[#allocation2 + $0x100] sm:$0xff]
        %v413 = vld [vmem:[#allocation2 + $0x108] sm:$0xff]
        %v414 = vld [vmem:[#allocation2 + $0x110] sm:$0xff]
        %v415 = vld [vmem:[#allocation2 + $0x118] sm:$0xff]
        %v416 = vld [vmem:[#allocation2 + $0x120] sm:$0xff]
        %v417 = vld [vmem:[#allocation2 + $0x128] sm:$0xff]
        %v418 = vld [vmem:[#allocation2 + $0x130] sm:$0xff]
        %v419 = vld [vmem:[#allocation2 + $0x138] sm:$0xff]
        %v420 = vld [vmem:[#allocation2 + $0x140] sm:$0xff]
        %v421 = vld [vmem:[#allocation2 + $0x148] sm:$0xff]
        %v422 = vld [vmem:[#allocation2 + $0x150] sm:$0xff]
        %v423 = vld [vmem:[#allocation2 + $0x158] sm:$0xff]
        %v424 = vld [vmem:[#allocation2 + $0x160] sm:$0xff]
        %v425 = vld [vmem:[#allocation2 + $0x168] sm:$0xff]
        %v426 = vld [vmem:[#allocation2 + $0x170] sm:$0xff]
        %v427 = vld [vmem:[#allocation2 + $0x178] sm:$0xff]
        %v428 = vld [vmem:[#allocation2 + $0x180] sm:$0xff]
        %v429 = vld [vmem:[#allocation2 + $0x188] sm:$0xff]
        %v430 = vld [vmem:[#allocation2 + $0x190] sm:$0xff]
        %v431 = vld [vmem:[#allocation2 + $0x198] sm:$0xff]
        %v432 = vld [vmem:[#allocation2 + $0x1a0] sm:$0xff]
        %v433 = vld [vmem:[#allocation2 + $0x1a8] sm:$0xff]
        %v434 = vld [vmem:[#allocation2 + $0x1b0] sm:$0xff]
        %v435 = vld [vmem:[#allocation2 + $0x1b8] sm:$0xff]
        %v436 = vld [vmem:[#allocation2 + $0x1c0] sm:$0xff]
        %v437 = vld [vmem:[#allocation2 + $0x1c8] sm:$0xff]
        %v438 = vld [vmem:[#allocation2 + $0x1d0] sm:$0xff]
        %v439 = vld [vmem:[#allocation2 + $0x1d8] sm:$0xff]
        %v440 = vld [vmem:[#allocation2 + $0x1e0] sm:$0xff]
        %v441 = vld [vmem:[#allocation2 + $0x1e8] sm:$0xff]
        %v442 = vld [vmem:[#allocation2 + $0x1f0] sm:$0xff]
        %v443 = vld [vmem:[#allocation2 + $0x1f8] sm:$0xff]
        %v444 = vld [vmem:[%s270] sm:$0xff]
        %v445 = vld [vmem:[%s270 + $0x8] sm:$0xff]
        %v446 = vld [vmem:[%s270 + $0x10] sm:$0xff]
        %v447 = vld [vmem:[%s270 + $0x18] sm:$0xff]
        %v448 = vld [vmem:[%s270 + $0x20] sm:$0xff]
        %v449 = vld [vmem:[%s270 + $0x28] sm:$0xff]
        %v450 = vld [vmem:[%s270 + $0x30] sm:$0xff]
        %v451 = vld [vmem:[%s270 + $0x38] sm:$0xff]
        %v452 = vld [vmem:[%s270 + $0x40] sm:$0xff]
        %v453 = vld [vmem:[%s270 + $0x48] sm:$0xff]
        %v454 = vld [vmem:[%s270 + $0x50] sm:$0xff]
        %v455 = vld [vmem:[%s270 + $0x58] sm:$0xff]
        %v456 = vld [vmem:[%s270 + $0x60] sm:$0xff]
        %v457 = vld [vmem:[%s270 + $0x68] sm:$0xff]
        %v458 = vld [vmem:[%s270 + $0x70] sm:$0xff]
        %v459 = vld [vmem:[%s270 + $0x78] sm:$0xff]
        %v460 = vld [vmem:[%s270 + $0x80] sm:$0xff]
        %v461 = vld [vmem:[%s270 + $0x88] sm:$0xff]
        %v462 = vld [vmem:[%s270 + $0x90] sm:$0xff]
        %v463 = vld [vmem:[%s270 + $0x98] sm:$0xff]
        %v464 = vld [vmem:[%s270 + $0xa0] sm:$0xff]
        %v465 = vld [vmem:[%s270 + $0xa8] sm:$0xff]
        %v466 = vld [vmem:[%s270 + $0xb0] sm:$0xff]
        %v467 = vld [vmem:[%s270 + $0xb8] sm:$0xff]
        %v468 = vld [vmem:[%s270 + $0xc0] sm:$0xff]
        %v469 = vld [vmem:[%s270 + $0xc8] sm:$0xff]
        %v470 = vld [vmem:[%s270 + $0xd0] sm:$0xff]
        %v471 = vld [vmem:[%s270 + $0xd8] sm:$0xff]
        %v472 = vld [vmem:[%s270 + $0xe0] sm:$0xff]
        %v473 = vld [vmem:[%s270 + $0xe8] sm:$0xff]
        %v474 = vld [vmem:[%s270 + $0xf0] sm:$0xff]
        %v475 = vld [vmem:[%s270 + $0xf8] sm:$0xff]
        %v476 = vld [vmem:[%s270 + $0x100] sm:$0xff]
        %v477 = vld [vmem:[%s270 + $0x108] sm:$0xff]
        %v478 = vld [vmem:[%s270 + $0x110] sm:$0xff]
        %v479 = vld [vmem:[%s270 + $0x118] sm:$0xff]
        %v480 = vld [vmem:[%s270 + $0x120] sm:$0xff]
        %v481 = vld [vmem:[%s270 + $0x128] sm:$0xff]
        %v482 = vld [vmem:[%s270 + $0x130] sm:$0xff]
        %v483 = vld [vmem:[%s270 + $0x138] sm:$0xff]
        %v484 = vld [vmem:[%s270 + $0x140] sm:$0xff]
        %v485 = vld [vmem:[%s270 + $0x148] sm:$0xff]
        %v486 = vld [vmem:[%s270 + $0x150] sm:$0xff]
        %v487 = vld [vmem:[%s270 + $0x158] sm:$0xff]
        %v488 = vld [vmem:[%s270 + $0x160] sm:$0xff]
        %v489 = vld [vmem:[%s270 + $0x168] sm:$0xff]
        %v490 = vld [vmem:[%s270 + $0x170] sm:$0xff]
        %v491 = vld [vmem:[%s270 + $0x178] sm:$0xff]
        %v492 = vld [vmem:[%s270 + $0x180] sm:$0xff]
        %v493 = vld [vmem:[%s270 + $0x188] sm:$0xff]
        %v494 = vld [vmem:[%s270 + $0x190] sm:$0xff]
        %v495 = vld [vmem:[%s270 + $0x198] sm:$0xff]
        %v496 = vld [vmem:[%s270 + $0x1a0] sm:$0xff]
        %v497 = vld [vmem:[%s270 + $0x1a8] sm:$0xff]
        %v498 = vld [vmem:[%s270 + $0x1b0] sm:$0xff]
        %v499 = vld [vmem:[%s270 + $0x1b8] sm:$0xff]
        %v500 = vld [vmem:[%s270 + $0x1c0] sm:$0xff]
        %v501 = vld [vmem:[%s270 + $0x1c8] sm:$0xff]
        %v502 = vld [vmem:[%s270 + $0x1d0] sm:$0xff]
        %v503 = vld [vmem:[%s270 + $0x1d8] sm:$0xff]
        %v504 = vld [vmem:[%s270 + $0x1e0] sm:$0xff]
        %v505 = vld [vmem:[%s270 + $0x1e8] sm:$0xff]
        %v506 = vld [vmem:[%s270 + $0x1f0] sm:$0xff]
        %v507 = vld [vmem:[%s270 + $0x1f8] sm:$0xff]
        %v508 = vld [vmem:[#allocation6] sm:$0xf]
        %v509 = vld [vmem:[#allocation6 + $0x4] sm:$0xf]
        %v510 = vld [vmem:[#allocation6 + $0x8] sm:$0xf]
        %v511 = vld [vmem:[#allocation6 + $0xc] sm:$0xf]
        %v512 = vld [vmem:[#allocation6 + $0x10] sm:$0xf]
        %v513 = vld [vmem:[#allocation6 + $0x14] sm:$0xf]
        %v514 = vld [vmem:[#allocation6 + $0x18] sm:$0xf]
        %v515 = vld [vmem:[#allocation6 + $0x1c] sm:$0xf]
        %v516 = vld [vmem:[#allocation6 + $0x20] sm:$0xf]
        %v517 = vld [vmem:[#allocation6 + $0x24] sm:$0xf]
        %v518 = vld [vmem:[#allocation6 + $0x28] sm:$0xf]
        %v519 = vld [vmem:[#allocation6 + $0x2c] sm:$0xf]
        %v520 = vld [vmem:[#allocation6 + $0x30] sm:$0xf]
        %v521 = vld [vmem:[#allocation6 + $0x34] sm:$0xf]
        %v522 = vld [vmem:[#allocation6 + $0x38] sm:$0xf]
        %v523 = vld [vmem:[#allocation6 + $0x3c] sm:$0xf]
        %v524 = vld [vmem:[#allocation6 + $0x40] sm:$0xf]
        %v525 = vld [vmem:[#allocation6 + $0x44] sm:$0xf]
        %v526 = vld [vmem:[#allocation6 + $0x48] sm:$0xf]
        %v527 = vld [vmem:[#allocation6 + $0x4c] sm:$0xf]
        %v528 = vld [vmem:[#allocation6 + $0x50] sm:$0xf]
        %v529 = vld [vmem:[#allocation6 + $0x54] sm:$0xf]
        %v530 = vld [vmem:[#allocation6 + $0x58] sm:$0xf]
        %v531 = vld [vmem:[#allocation6 + $0x5c] sm:$0xf]
        %v532 = vld [vmem:[#allocation6 + $0x60] sm:$0xf]
        %v533 = vld [vmem:[#allocation6 + $0x64] sm:$0xf]
        %v534 = vld [vmem:[#allocation6 + $0x68] sm:$0xf]
        %v535 = vld [vmem:[#allocation6 + $0x6c] sm:$0xf]
        %v536 = vld [vmem:[#allocation6 + $0x70] sm:$0xf]
        %v537 = vld [vmem:[#allocation6 + $0x74] sm:$0xf]
        %v538 = vld [vmem:[#allocation6 + $0x78] sm:$0xf]
        %v539 = vld [vmem:[#allocation6 + $0x7c] sm:$0xf]
        %v604 = vunpack.c.l.b16 %v444
        %v605 = vunpack.c.h.b16 %v444
        %v606 = vunpack.c.l.b16 %v445
        %v607 = vunpack.c.h.b16 %v445
        %v608 = vunpack.c.l.b16 %v446
        %v609 = vunpack.c.h.b16 %v446
        %v610 = vunpack.c.l.b16 %v447
        %v611 = vunpack.c.h.b16 %v447
        %v612 = vunpack.c.l.b16 %v448
        %v613 = vunpack.c.h.b16 %v448
        %v614 = vunpack.c.l.b16 %v449
        %v615 = vunpack.c.h.b16 %v449
        %v616 = vunpack.c.l.b16 %v450
        %v617 = vunpack.c.h.b16 %v450
        %v618 = vunpack.c.l.b16 %v451
        %v619 = vunpack.c.h.b16 %v451
        %v620 = vunpack.c.l.b16 %v452
        %v621 = vunpack.c.h.b16 %v452
        %v622 = vunpack.c.l.b16 %v453
        %v623 = vunpack.c.h.b16 %v453
        %v624 = vunpack.c.l.b16 %v454
        %v625 = vunpack.c.h.b16 %v454
        %v626 = vunpack.c.l.b16 %v455
        %v627 = vunpack.c.h.b16 %v455
        %v628 = vunpack.c.l.b16 %v456
        %v629 = vunpack.c.h.b16 %v456
        %v630 = vunpack.c.l.b16 %v457
        %v631 = vunpack.c.h.b16 %v457
        %v632 = vunpack.c.l.b16 %v458
        %v633 = vunpack.c.h.b16 %v458
        %v634 = vunpack.c.l.b16 %v459
        %v635 = vunpack.c.h.b16 %v459
        %v636 = vunpack.c.l.b16 %v460
        %v637 = vunpack.c.h.b16 %v460
        %v638 = vunpack.c.l.b16 %v461
        %v639 = vunpack.c.h.b16 %v461
        %v640 = vunpack.c.l.b16 %v462
        %v641 = vunpack.c.h.b16 %v462
        %v642 = vunpack.c.l.b16 %v463
        %v643 = vunpack.c.h.b16 %v463
        %v644 = vunpack.c.l.b16 %v464
        %v645 = vunpack.c.h.b16 %v464
        %v646 = vunpack.c.l.b16 %v465
        %v647 = vunpack.c.h.b16 %v465
        %v648 = vunpack.c.l.b16 %v466
        %v649 = vunpack.c.h.b16 %v466
        %v650 = vunpack.c.l.b16 %v467
        %v651 = vunpack.c.h.b16 %v467
        %v652 = vunpack.c.l.b16 %v468
        %v653 = vunpack.c.h.b16 %v468
        %v654 = vunpack.c.l.b16 %v469
        %v655 = vunpack.c.h.b16 %v469
        %v656 = vunpack.c.l.b16 %v470
        %v657 = vunpack.c.h.b16 %v470
        %v658 = vunpack.c.l.b16 %v471
        %v659 = vunpack.c.h.b16 %v471
        %v660 = vunpack.c.l.b16 %v472
        %v661 = vunpack.c.h.b16 %v472
        %v662 = vunpack.c.l.b16 %v473
        %v663 = vunpack.c.h.b16 %v473
        %v664 = vunpack.c.l.b16 %v474
        %v665 = vunpack.c.h.b16 %v474
        %v666 = vunpack.c.l.b16 %v475
        %v667 = vunpack.c.h.b16 %v475
        %v668 = vunpack.c.l.b16 %v476
        %v669 = vunpack.c.h.b16 %v476
        %v670 = vunpack.c.l.b16 %v477
        %v671 = vunpack.c.h.b16 %v477
        %v672 = vunpack.c.l.b16 %v478
        %v673 = vunpack.c.h.b16 %v478
        %v674 = vunpack.c.l.b16 %v479
        %v675 = vunpack.c.h.b16 %v479
        %v676 = vunpack.c.l.b16 %v480
        %v677 = vunpack.c.h.b16 %v480
        %v678 = vunpack.c.l.b16 %v481
        %v679 = vunpack.c.h.b16 %v481
        %v680 = vunpack.c.l.b16 %v482
        %v681 = vunpack.c.h.b16 %v482
        %v682 = vunpack.c.l.b16 %v483
        %v683 = vunpack.c.h.b16 %v483
        %v684 = vunpack.c.l.b16 %v484
        %v685 = vunpack.c.h.b16 %v484
        %v686 = vunpack.c.l.b16 %v485
        %v687 = vunpack.c.h.b16 %v485
        %v688 = vunpack.c.l.b16 %v486
        %v689 = vunpack.c.h.b16 %v486
        %v690 = vunpack.c.l.b16 %v487
        %v691 = vunpack.c.h.b16 %v487
        %v692 = vunpack.c.l.b16 %v488
        %v693 = vunpack.c.h.b16 %v488
        %v694 = vunpack.c.l.b16 %v489
        %v695 = vunpack.c.h.b16 %v489
        %v696 = vunpack.c.l.b16 %v490
        %v697 = vunpack.c.h.b16 %v490
        %v698 = vunpack.c.l.b16 %v491
        %v699 = vunpack.c.h.b16 %v491
        %v700 = vunpack.c.l.b16 %v492
        %v701 = vunpack.c.h.b16 %v492
        %v702 = vunpack.c.l.b16 %v493
        %v703 = vunpack.c.h.b16 %v493
        %v704 = vunpack.c.l.b16 %v494
        %v705 = vunpack.c.h.b16 %v494
        %v706 = vunpack.c.l.b16 %v495
        %v707 = vunpack.c.h.b16 %v495
        %v708 = vunpack.c.l.b16 %v496
        %v709 = vunpack.c.h.b16 %v496
        %v710 = vunpack.c.l.b16 %v497
        %v711 = vunpack.c.h.b16 %v497
        %v712 = vunpack.c.l.b16 %v498
        %v713 = vunpack.c.h.b16 %v498
        %v714 = vunpack.c.l.b16 %v499
        %v715 = vunpack.c.h.b16 %v499
        %v716 = vunpack.c.l.b16 %v500
        %v717 = vunpack.c.h.b16 %v500
        %v718 = vunpack.c.l.b16 %v501
        %v719 = vunpack.c.h.b16 %v501
        %v720 = vunpack.c.l.b16 %v502
        %v721 = vunpack.c.h.b16 %v502
        %v722 = vunpack.c.l.b16 %v503
        %v723 = vunpack.c.h.b16 %v503
        %v724 = vunpack.c.l.b16 %v504
        %v725 = vunpack.c.h.b16 %v504
        %v726 = vunpack.c.l.b16 %v505
        %v727 = vunpack.c.h.b16 %v505
        %v728 = vunpack.c.l.b16 %v506
        %v729 = vunpack.c.h.b16 %v506
        %v730 = vunpack.c.l.b16 %v507
        %v731 = vunpack.c.h.b16 %v507
        %v732 = vpack.c.b16 %v606, %v604
        %v733 = vpack.c.b16 %v607, %v605
        %v734 = vpack.c.b16 %v610, %v608
        %v735 = vpack.c.b16 %v611, %v609
        %v736 = vpack.c.b16 %v614, %v612
        %v737 = vpack.c.b16 %v615, %v613
        %v738 = vpack.c.b16 %v618, %v616
        %v739 = vpack.c.b16 %v619, %v617
        %v740 = vpack.c.b16 %v622, %v620
        %v741 = vpack.c.b16 %v623, %v621
        %v742 = vpack.c.b16 %v626, %v624
        %v743 = vpack.c.b16 %v627, %v625
        %v744 = vpack.c.b16 %v630, %v628
        %v745 = vpack.c.b16 %v631, %v629
        %v746 = vpack.c.b16 %v634, %v632
        %v747 = vpack.c.b16 %v635, %v633
        %v748 = vpack.c.b16 %v638, %v636
        %v749 = vpack.c.b16 %v639, %v637
        %v750 = vpack.c.b16 %v642, %v640
        %v751 = vpack.c.b16 %v643, %v641
        %v752 = vpack.c.b16 %v646, %v644
        %v753 = vpack.c.b16 %v647, %v645
        %v754 = vpack.c.b16 %v650, %v648
        %v755 = vpack.c.b16 %v651, %v649
        %v756 = vpack.c.b16 %v654, %v652
        %v757 = vpack.c.b16 %v655, %v653
        %v758 = vpack.c.b16 %v658, %v656
        %v759 = vpack.c.b16 %v659, %v657
        %v760 = vpack.c.b16 %v662, %v660
        %v761 = vpack.c.b16 %v663, %v661
        %v762 = vpack.c.b16 %v666, %v664
        %v763 = vpack.c.b16 %v667, %v665
        %v764 = vpack.c.b16 %v670, %v668
        %v765 = vpack.c.b16 %v671, %v669
        %v766 = vpack.c.b16 %v674, %v672
        %v767 = vpack.c.b16 %v675, %v673
        %v768 = vpack.c.b16 %v678, %v676
        %v769 = vpack.c.b16 %v679, %v677
        %v770 = vpack.c.b16 %v682, %v680
        %v771 = vpack.c.b16 %v683, %v681
        %v772 = vpack.c.b16 %v686, %v684
        %v773 = vpack.c.b16 %v687, %v685
        %v774 = vpack.c.b16 %v690, %v688
        %v775 = vpack.c.b16 %v691, %v689
        %v776 = vpack.c.b16 %v694, %v692
        %v777 = vpack.c.b16 %v695, %v693
        %v778 = vpack.c.b16 %v698, %v696
        %v779 = vpack.c.b16 %v699, %v697
        %v780 = vpack.c.b16 %v702, %v700
        %v781 = vpack.c.b16 %v703, %v701
        %v782 = vpack.c.b16 %v706, %v704
        %v783 = vpack.c.b16 %v707, %v705
        %v784 = vpack.c.b16 %v710, %v708
        %v785 = vpack.c.b16 %v711, %v709
        %v786 = vpack.c.b16 %v714, %v712
        %v787 = vpack.c.b16 %v715, %v713
        %v788 = vpack.c.b16 %v718, %v716
        %v789 = vpack.c.b16 %v719, %v717
        %v790 = vpack.c.b16 %v722, %v720
        %v791 = vpack.c.b16 %v723, %v721
        %v792 = vpack.c.b16 %v726, %v724
        %v793 = vpack.c.b16 %v727, %v725
        %v794 = vpack.c.b16 %v730, %v728
        %v795 = vpack.c.b16 %v731, %v729
        %v892 = vunpack.c.l.b16 %v508
        %v893 = vunpack.c.l.b16 %v509
        %v894 = vunpack.c.l.b16 %v510
        %v895 = vunpack.c.l.b16 %v511
        %v896 = vunpack.c.l.b16 %v512
        %v897 = vunpack.c.l.b16 %v513
        %v898 = vunpack.c.l.b16 %v514
        %v899 = vunpack.c.l.b16 %v515
        %v900 = vunpack.c.l.b16 %v516
        %v901 = vunpack.c.l.b16 %v517
        %v902 = vunpack.c.l.b16 %v518
        %v903 = vunpack.c.l.b16 %v519
        %v904 = vunpack.c.l.b16 %v520
        %v905 = vunpack.c.l.b16 %v521
        %v906 = vunpack.c.l.b16 %v522
        %v907 = vunpack.c.l.b16 %v523
        %v908 = vunpack.c.l.b16 %v524
        %v909 = vunpack.c.l.b16 %v525
        %v910 = vunpack.c.l.b16 %v526
        %v911 = vunpack.c.l.b16 %v527
        %v912 = vunpack.c.l.b16 %v528
        %v913 = vunpack.c.l.b16 %v529
        %v914 = vunpack.c.l.b16 %v530
        %v915 = vunpack.c.l.b16 %v531
        %v916 = vunpack.c.l.b16 %v532
        %v917 = vunpack.c.l.b16 %v533
        %v918 = vunpack.c.l.b16 %v534
        %v919 = vunpack.c.l.b16 %v535
        %v920 = vunpack.c.l.b16 %v536
        %v921 = vunpack.c.l.b16 %v537
        %v922 = vunpack.c.l.b16 %v538
        %v923 = vunpack.c.l.b16 %v539
        %v924 = vpack.c.b16 %v893, %v892
        %v925 = vpack.c.b16 %v895, %v894
        %v926 = vpack.c.b16 %v897, %v896
        %v927 = vpack.c.b16 %v899, %v898
        %v928 = vpack.c.b16 %v901, %v900
        %v929 = vpack.c.b16 %v903, %v902
        %v930 = vpack.c.b16 %v905, %v904
        %v931 = vpack.c.b16 %v907, %v906
        %v932 = vpack.c.b16 %v909, %v908
        %v933 = vpack.c.b16 %v911, %v910
        %v934 = vpack.c.b16 %v913, %v912
        %v935 = vpack.c.b16 %v915, %v914
        %v936 = vpack.c.b16 %v917, %v916
        %v937 = vpack.c.b16 %v919, %v918
        %v938 = vpack.c.b16 %v921, %v920
        %v939 = vpack.c.b16 %v923, %v922
        %956 = vmatprep.subr.bf16.mxu0 0
        %957 = vmatpush1.bf16.msra.mxu0 %v924
        %958 = vmatprep.subr.bf16.mxu0 0
        %959 = vmatpush1.bf16.msra.mxu0 %v925
        %960 = vmatprep.subr.bf16.mxu0 0
        %961 = vmatpush1.bf16.msra.mxu0 %v926
        %962 = vmatprep.subr.bf16.mxu0 0
        %963 = vmatpush1.bf16.msra.mxu0 %v927
        %964 = vmatprep.subr.bf16.mxu0 0
        %965 = vmatpush1.bf16.msra.mxu0 %v928
        %966 = vmatprep.subr.bf16.mxu0 0
        %967 = vmatpush1.bf16.msra.mxu0 %v929
        %968 = vmatprep.subr.bf16.mxu0 0
        %969 = vmatpush1.bf16.msra.mxu0 %v930
        %970 = vmatprep.subr.bf16.mxu0 0
        %971 = vmatpush1.bf16.msra.mxu0 %v931
        %972 = vmatprep.subr.bf16.mxu0 0
        %973 = vmatpush1.bf16.msra.mxu0 %v932
        %974 = vmatprep.subr.bf16.mxu0 0
        %975 = vmatpush1.bf16.msra.mxu0 %v933
        %976 = vmatprep.subr.bf16.mxu0 0
        %977 = vmatpush1.bf16.msra.mxu0 %v934
        %978 = vmatprep.subr.bf16.mxu0 0
        %979 = vmatpush1.bf16.msra.mxu0 %v935
        %980 = vmatprep.subr.bf16.mxu0 0
        %981 = vmatpush1.bf16.msra.mxu0 %v936
        %982 = vmatprep.subr.bf16.mxu0 0
        %983 = vmatpush1.bf16.msra.mxu0 %v937
        %984 = vmatprep.subr.bf16.mxu0 0
        %985 = vmatpush1.bf16.msra.mxu0 %v938
        %986 = vmatprep.subr.bf16.mxu0 0
        %987 = vmatpush1.bf16.msra.mxu0 %v939
        %988 = vmatprep.mubr.bf16.mxu0 %v733
        %989 = vmatmul.mubr.bf16.gmra.mrb[0].mxu0 %v732
        %v990 = vpop.f32.mrb[0].mxu0
        %v991 = vadd.f32 0.0, %v990
        %v992 = vpop.f32.mrb[0].mxu0
        %v993 = vpop.f32.mrb[0].mxu0
        %v994 = vadd.f32 0.0, %v993
        %v995 = vpop.f32.mrb[0].mxu0
        %996 = vmatprep.mubr.bf16.mxu0 %v735
        %997 = vmatmul.mubr.bf16.gmra.mrb[0].mxu0 %v734
        %v998 = vpop.f32.mrb[0].mxu0
        %v999 = vadd.f32 0.0, %v998
        %v1000 = vpop.f32.mrb[0].mxu0
        %v1001 = vpop.f32.mrb[0].mxu0
        %v1002 = vadd.f32 0.0, %v1001
        %v1003 = vpop.f32.mrb[0].mxu0
        %1004 = vmatprep.mubr.bf16.mxu0 %v737
        %1005 = vmatmul.mubr.bf16.gmra.mrb[0].mxu0 %v736
        %v1006 = vpop.f32.mrb[0].mxu0
        %v1007 = vadd.f32 0.0, %v1006
        %v1008 = vpop.f32.mrb[0].mxu0
        %v1009 = vpop.f32.mrb[0].mxu0
        %v1010 = vadd.f32 0.0, %v1009
        %v1011 = vpop.f32.mrb[0].mxu0
        %1012 = vmatprep.mubr.bf16.mxu0 %v739
        %1013 = vmatmul.mubr.bf16.gmra.mrb[0].mxu0 %v738
        %v1014 = vpop.f32.mrb[0].mxu0
        %v1015 = vadd.f32 0.0, %v1014
        %v1016 = vpop.f32.mrb[0].mxu0
        %v1017 = vpop.f32.mrb[0].mxu0
        %v1018 = vadd.f32 0.0, %v1017
        %v1019 = vpop.f32.mrb[0].mxu0
        %1020 = vmatprep.mubr.bf16.mxu0 %v741
        %1021 = vmatmul.mubr.bf16.gmra.mrb[0].mxu0 %v740
        %v1022 = vpop.f32.mrb[0].mxu0
        %v1023 = vadd.f32 0.0, %v1022
        %v1024 = vpop.f32.mrb[0].mxu0
        %v1025 = vpop.f32.mrb[0].mxu0
        %v1026 = vadd.f32 0.0, %v1025
        %v1027 = vpop.f32.mrb[0].mxu0
        %1028 = vmatprep.mubr.bf16.mxu0 %v743
        %1029 = vmatmul.mubr.bf16.gmra.mrb[0].mxu0 %v742
        %v1030 = vpop.f32.mrb[0].mxu0
        %v1031 = vadd.f32 0.0, %v1030
        %v1032 = vpop.f32.mrb[0].mxu0
        %v1033 = vpop.f32.mrb[0].mxu0
        %v1034 = vadd.f32 0.0, %v1033
        %v1035 = vpop.f32.mrb[0].mxu0
        %1036 = vmatprep.mubr.bf16.mxu0 %v745
        %1037 = vmatmul.mubr.bf16.gmra.mrb[0].mxu0 %v744
        %v1038 = vpop.f32.mrb[0].mxu0
        %v1039 = vadd.f32 0.0, %v1038
        %v1040 = vpop.f32.mrb[0].mxu0
        %v1041 = vpop.f32.mrb[0].mxu0
        %v1042 = vadd.f32 0.0, %v1041
        %v1043 = vpop.f32.mrb[0].mxu0
        %1044 = vmatprep.mubr.bf16.mxu0 %v747
        %1045 = vmatmul.mubr.bf16.gmra.mrb[0].mxu0 %v746
        %v1046 = vpop.f32.mrb[0].mxu0
        %v1047 = vadd.f32 0.0, %v1046
        %v1048 = vpop.f32.mrb[0].mxu0
        %v1049 = vpop.f32.mrb[0].mxu0
        %v1050 = vadd.f32 0.0, %v1049
        %v1051 = vpop.f32.mrb[0].mxu0
        %1052 = vmatprep.mubr.bf16.mxu0 %v749
        %1053 = vmatmul.mubr.bf16.gmra.mrb[0].mxu0 %v748
        %v1054 = vpop.f32.mrb[0].mxu0
        %v1055 = vadd.f32 0.0, %v1054
        %v1056 = vpop.f32.mrb[0].mxu0
        %v1057 = vpop.f32.mrb[0].mxu0
        %v1058 = vadd.f32 0.0, %v1057
        %v1059 = vpop.f32.mrb[0].mxu0
        %1060 = vmatprep.mubr.bf16.mxu0 %v751
        %1061 = vmatmul.mubr.bf16.gmra.mrb[0].mxu0 %v750
        %v1062 = vpop.f32.mrb[0].mxu0
        %v1063 = vadd.f32 0.0, %v1062
        %v1064 = vpop.f32.mrb[0].mxu0
        %v1065 = vpop.f32.mrb[0].mxu0
        %v1066 = vadd.f32 0.0, %v1065
        %v1067 = vpop.f32.mrb[0].mxu0
        %1068 = vmatprep.mubr.bf16.mxu0 %v753
        %1069 = vmatmul.mubr.bf16.gmra.mrb[0].mxu0 %v752
        %v1070 = vpop.f32.mrb[0].mxu0
        %v1071 = vadd.f32 0.0, %v1070
        %v1072 = vpop.f32.mrb[0].mxu0
        %v1073 = vpop.f32.mrb[0].mxu0
        %v1074 = vadd.f32 0.0, %v1073
        %v1075 = vpop.f32.mrb[0].mxu0
        %1076 = vmatprep.mubr.bf16.mxu0 %v755
        %1077 = vmatmul.mubr.bf16.gmra.mrb[0].mxu0 %v754
        %v1078 = vpop.f32.mrb[0].mxu0
        %v1079 = vadd.f32 0.0, %v1078
        %v1080 = vpop.f32.mrb[0].mxu0
        %v1081 = vpop.f32.mrb[0].mxu0
        %v1082 = vadd.f32 0.0, %v1081
        %v1083 = vpop.f32.mrb[0].mxu0
        %1084 = vmatprep.mubr.bf16.mxu0 %v757
        %1085 = vmatmul.mubr.bf16.gmra.mrb[0].mxu0 %v756
        %v1086 = vpop.f32.mrb[0].mxu0
        %v1087 = vadd.f32 0.0, %v1086
        %v1088 = vpop.f32.mrb[0].mxu0
        %v1089 = vpop.f32.mrb[0].mxu0
        %v1090 = vadd.f32 0.0, %v1089
        %v1091 = vpop.f32.mrb[0].mxu0
        %1092 = vmatprep.mubr.bf16.mxu0 %v759
        %1093 = vmatmul.mubr.bf16.gmra.mrb[0].mxu0 %v758
        %v1094 = vpop.f32.mrb[0].mxu0
        %v1095 = vadd.f32 0.0, %v1094
        %v1096 = vpop.f32.mrb[0].mxu0
        %v1097 = vpop.f32.mrb[0].mxu0
        %v1098 = vadd.f32 0.0, %v1097
        %v1099 = vpop.f32.mrb[0].mxu0
        %1100 = vmatprep.mubr.bf16.mxu0 %v761
        %1101 = vmatmul.mubr.bf16.gmra.mrb[0].mxu0 %v760
        %v1102 = vpop.f32.mrb[0].mxu0
        %v1103 = vadd.f32 0.0, %v1102
        %v1104 = vpop.f32.mrb[0].mxu0
        %v1105 = vpop.f32.mrb[0].mxu0
        %v1106 = vadd.f32 0.0, %v1105
        %v1107 = vpop.f32.mrb[0].mxu0
        %1108 = vmatprep.mubr.bf16.mxu0 %v763
        %1109 = vmatmul.mubr.bf16.gmra.mrb[0].mxu0 %v762
        %v1110 = vpop.f32.mrb[0].mxu0
        %v1111 = vadd.f32 0.0, %v1110
        %v1112 = vpop.f32.mrb[0].mxu0
        %v1113 = vpop.f32.mrb[0].mxu0
        %v1114 = vadd.f32 0.0, %v1113
        %v1115 = vpop.f32.mrb[0].mxu0
        %1116 = vmatprep.mubr.bf16.mxu0 %v765
        %1117 = vmatmul.mubr.bf16.gmra.mrb[0].mxu0 %v764
        %v1118 = vpop.f32.mrb[0].mxu0
        %v1119 = vadd.f32 0.0, %v1118
        %v1120 = vpop.f32.mrb[0].mxu0
        %v1121 = vpop.f32.mrb[0].mxu0
        %v1122 = vadd.f32 0.0, %v1121
        %v1123 = vpop.f32.mrb[0].mxu0
        %1124 = vmatprep.mubr.bf16.mxu0 %v767
        %1125 = vmatmul.mubr.bf16.gmra.mrb[0].mxu0 %v766
        %v1126 = vpop.f32.mrb[0].mxu0
        %v1127 = vadd.f32 0.0, %v1126
        %v1128 = vpop.f32.mrb[0].mxu0
        %v1129 = vpop.f32.mrb[0].mxu0
        %v1130 = vadd.f32 0.0, %v1129
        %v1131 = vpop.f32.mrb[0].mxu0
        %1132 = vmatprep.mubr.bf16.mxu0 %v769
        %1133 = vmatmul.mubr.bf16.gmra.mrb[0].mxu0 %v768
        %v1134 = vpop.f32.mrb[0].mxu0
        %v1135 = vadd.f32 0.0, %v1134
        %v1136 = vpop.f32.mrb[0].mxu0
        %v1137 = vpop.f32.mrb[0].mxu0
        %v1138 = vadd.f32 0.0, %v1137
        %v1139 = vpop.f32.mrb[0].mxu0
        %1140 = vmatprep.mubr.bf16.mxu0 %v771
        %1141 = vmatmul.mubr.bf16.gmra.mrb[0].mxu0 %v770
        %v1142 = vpop.f32.mrb[0].mxu0
        %v1143 = vadd.f32 0.0, %v1142
        %v1144 = vpop.f32.mrb[0].mxu0
        %v1145 = vpop.f32.mrb[0].mxu0
        %v1146 = vadd.f32 0.0, %v1145
        %v1147 = vpop.f32.mrb[0].mxu0
        %1148 = vmatprep.mubr.bf16.mxu0 %v773
        %1149 = vmatmul.mubr.bf16.gmra.mrb[0].mxu0 %v772
        %v1150 = vpop.f32.mrb[0].mxu0
        %v1151 = vadd.f32 0.0, %v1150
        %v1152 = vpop.f32.mrb[0].mxu0
        %v1153 = vpop.f32.mrb[0].mxu0
        %v1154 = vadd.f32 0.0, %v1153
        %v1155 = vpop.f32.mrb[0].mxu0
        %1156 = vmatprep.mubr.bf16.mxu0 %v775
        %1157 = vmatmul.mubr.bf16.gmra.mrb[0].mxu0 %v774
        %v1158 = vpop.f32.mrb[0].mxu0
        %v1159 = vadd.f32 0.0, %v1158
        %v1160 = vpop.f32.mrb[0].mxu0
        %v1161 = vpop.f32.mrb[0].mxu0
        %v1162 = vadd.f32 0.0, %v1161
        %v1163 = vpop.f32.mrb[0].mxu0
        %1164 = vmatprep.mubr.bf16.mxu0 %v777
        %1165 = vmatmul.mubr.bf16.gmra.mrb[0].mxu0 %v776
        %v1166 = vpop.f32.mrb[0].mxu0
        %v1167 = vadd.f32 0.0, %v1166
        %v1168 = vpop.f32.mrb[0].mxu0
        %v1169 = vpop.f32.mrb[0].mxu0
        %v1170 = vadd.f32 0.0, %v1169
        %v1171 = vpop.f32.mrb[0].mxu0
        %1172 = vmatprep.mubr.bf16.mxu0 %v779
        %1173 = vmatmul.mubr.bf16.gmra.mrb[0].mxu0 %v778
        %v1174 = vpop.f32.mrb[0].mxu0
        %v1175 = vadd.f32 0.0, %v1174
        %v1176 = vpop.f32.mrb[0].mxu0
        %v1177 = vpop.f32.mrb[0].mxu0
        %v1178 = vadd.f32 0.0, %v1177
        %v1179 = vpop.f32.mrb[0].mxu0
        %1180 = vmatprep.mubr.bf16.mxu0 %v781
        %1181 = vmatmul.mubr.bf16.gmra.mrb[0].mxu0 %v780
        %v1182 = vpop.f32.mrb[0].mxu0
        %v1183 = vadd.f32 0.0, %v1182
        %v1184 = vpop.f32.mrb[0].mxu0
        %v1185 = vpop.f32.mrb[0].mxu0
        %v1186 = vadd.f32 0.0, %v1185
        %v1187 = vpop.f32.mrb[0].mxu0
        %1188 = vmatprep.mubr.bf16.mxu0 %v783
        %1189 = vmatmul.mubr.bf16.gmra.mrb[0].mxu0 %v782
        %v1190 = vpop.f32.mrb[0].mxu0
        %v1191 = vadd.f32 0.0, %v1190
        %v1192 = vpop.f32.mrb[0].mxu0
        %v1193 = vpop.f32.mrb[0].mxu0
        %v1194 = vadd.f32 0.0, %v1193
        %v1195 = vpop.f32.mrb[0].mxu0
        %1196 = vmatprep.mubr.bf16.mxu0 %v785
        %1197 = vmatmul.mubr.bf16.gmra.mrb[0].mxu0 %v784
        %v1198 = vpop.f32.mrb[0].mxu0
        %v1199 = vadd.f32 0.0, %v1198
        %v1200 = vpop.f32.mrb[0].mxu0
        %v1201 = vpop.f32.mrb[0].mxu0
        %v1202 = vadd.f32 0.0, %v1201
        %v1203 = vpop.f32.mrb[0].mxu0
        %1204 = vmatprep.mubr.bf16.mxu0 %v787
        %1205 = vmatmul.mubr.bf16.gmra.mrb[0].mxu0 %v786
        %v1206 = vpop.f32.mrb[0].mxu0
        %v1207 = vadd.f32 0.0, %v1206
        %v1208 = vpop.f32.mrb[0].mxu0
        %v1209 = vpop.f32.mrb[0].mxu0
        %v1210 = vadd.f32 0.0, %v1209
        %v1211 = vpop.f32.mrb[0].mxu0
        %1212 = vmatprep.mubr.bf16.mxu0 %v789
        %1213 = vmatmul.mubr.bf16.gmra.mrb[0].mxu0 %v788
        %v1214 = vpop.f32.mrb[0].mxu0
        %v1215 = vadd.f32 0.0, %v1214
        %v1216 = vpop.f32.mrb[0].mxu0
        %v1217 = vpop.f32.mrb[0].mxu0
        %v1218 = vadd.f32 0.0, %v1217
        %v1219 = vpop.f32.mrb[0].mxu0
        %1220 = vmatprep.mubr.bf16.mxu0 %v791
        %1221 = vmatmul.mubr.bf16.gmra.mrb[0].mxu0 %v790
        %v1222 = vpop.f32.mrb[0].mxu0
        %v1223 = vadd.f32 0.0, %v1222
        %v1224 = vpop.f32.mrb[0].mxu0
        %v1225 = vpop.f32.mrb[0].mxu0
        %v1226 = vadd.f32 0.0, %v1225
        %v1227 = vpop.f32.mrb[0].mxu0
        %1228 = vmatprep.mubr.bf16.mxu0 %v793
        %1229 = vmatmul.mubr.bf16.gmra.mrb[0].mxu0 %v792
        %v1230 = vpop.f32.mrb[0].mxu0
        %v1231 = vadd.f32 0.0, %v1230
        %v1232 = vpop.f32.mrb[0].mxu0
        %v1233 = vpop.f32.mrb[0].mxu0
        %v1234 = vadd.f32 0.0, %v1233
        %v1235 = vpop.f32.mrb[0].mxu0
        %1236 = vmatprep.mubr.bf16.mxu0 %v795
        %1237 = vmatmul.mubr.bf16.gmra.mrb[0].mxu0 %v794
        %v1238 = vpop.f32.mrb[0].mxu0
        %v1239 = vadd.f32 0.0, %v1238
        %v1240 = vpop.f32.mrb[0].mxu0
        %v1241 = vpop.f32.mrb[0].mxu0
        %v1242 = vadd.f32 0.0, %v1241
        %v1243 = vpop.f32.mrb[0].mxu0
        %1244 = vdwg.mxu0
        %v1245 = vadd.f32 %v380, %v991
        %v1246 = vadd.f32 %v381, %v994
        %v1247 = vadd.f32 %v382, %v999
        %v1248 = vadd.f32 %v383, %v1002
        %v1249 = vadd.f32 %v384, %v1007
        %v1250 = vadd.f32 %v385, %v1010
        %v1251 = vadd.f32 %v386, %v1015
        %v1252 = vadd.f32 %v387, %v1018
        %v1253 = vadd.f32 %v388, %v1023
        %v1254 = vadd.f32 %v389, %v1026
        %v1255 = vadd.f32 %v390, %v1031
        %v1256 = vadd.f32 %v391, %v1034
        %v1257 = vadd.f32 %v392, %v1039
        %v1258 = vadd.f32 %v393, %v1042
        %v1259 = vadd.f32 %v394, %v1047
        %v1260 = vadd.f32 %v395, %v1050
        %v1261 = vadd.f32 %v396, %v1055
        %v1262 = vadd.f32 %v397, %v1058
        %v1263 = vadd.f32 %v398, %v1063
        %v1264 = vadd.f32 %v399, %v1066
        %v1265 = vadd.f32 %v400, %v1071
        %v1266 = vadd.f32 %v401, %v1074
        %v1267 = vadd.f32 %v402, %v1079
        %v1268 = vadd.f32 %v403, %v1082
        %v1269 = vadd.f32 %v404, %v1087
        %v1270 = vadd.f32 %v405, %v1090
        %v1271 = vadd.f32 %v406, %v1095
        %v1272 = vadd.f32 %v407, %v1098
        %v1273 = vadd.f32 %v408, %v1103
        %v1274 = vadd.f32 %v409, %v1106
        %v1275 = vadd.f32 %v410, %v1111
        %v1276 = vadd.f32 %v411, %v1114
        %v1277 = vadd.f32 %v412, %v1119
        %v1278 = vadd.f32 %v413, %v1122
        %v1279 = vadd.f32 %v414, %v1127
        %v1280 = vadd.f32 %v415, %v1130
        %v1281 = vadd.f32 %v416, %v1135
        %v1282 = vadd.f32 %v417, %v1138
        %v1283 = vadd.f32 %v418, %v1143
        %v1284 = vadd.f32 %v419, %v1146
        %v1285 = vadd.f32 %v420, %v1151
        %v1286 = vadd.f32 %v421, %v1154
        %v1287 = vadd.f32 %v422, %v1159
        %v1288 = vadd.f32 %v423, %v1162
        %v1289 = vadd.f32 %v424, %v1167
        %v1290 = vadd.f32 %v425, %v1170
        %v1291 = vadd.f32 %v426, %v1175
        %v1292 = vadd.f32 %v427, %v1178
        %v1293 = vadd.f32 %v428, %v1183
        %v1294 = vadd.f32 %v429, %v1186
        %v1295 = vadd.f32 %v430, %v1191
        %v1296 = vadd.f32 %v431, %v1194
        %v1297 = vadd.f32 %v432, %v1199
        %v1298 = vadd.f32 %v433, %v1202
        %v1299 = vadd.f32 %v434, %v1207
        %v1300 = vadd.f32 %v435, %v1210
        %v1301 = vadd.f32 %v436, %v1215
        %v1302 = vadd.f32 %v437, %v1218
        %v1303 = vadd.f32 %v438, %v1223
        %v1304 = vadd.f32 %v439, %v1226
        %v1305 = vadd.f32 %v440, %v1231
        %v1306 = vadd.f32 %v441, %v1234
        %v1307 = vadd.f32 %v442, %v1239
        %v1308 = vadd.f32 %v443, %v1242
        %1309 = vst [vmem:[#allocation2] sm:$0xff] %v1245
        %1310 = vst [vmem:[#allocation2 + $0x8] sm:$0xff] %v1246
        %1311 = vst [vmem:[#allocation2 + $0x10] sm:$0xff] %v1247
        %1312 = vst [vmem:[#allocation2 + $0x18] sm:$0xff] %v1248
        %1313 = vst [vmem:[#allocation2 + $0x20] sm:$0xff] %v1249
        %1314 = vst [vmem:[#allocation2 + $0x28] sm:$0xff] %v1250
        %1315 = vst [vmem:[#allocation2 + $0x30] sm:$0xff] %v1251
        %1316 = vst [vmem:[#allocation2 + $0x38] sm:$0xff] %v1252
        %1317 = vst [vmem:[#allocation2 + $0x40] sm:$0xff] %v1253
        %1318 = vst [vmem:[#allocation2 + $0x48] sm:$0xff] %v1254
        %1319 = vst [vmem:[#allocation2 + $0x50] sm:$0xff] %v1255
        %1320 = vst [vmem:[#allocation2 + $0x58] sm:$0xff] %v1256
        %1321 = vst [vmem:[#allocation2 + $0x60] sm:$0xff] %v1257
        %1322 = vst [vmem:[#allocation2 + $0x68] sm:$0xff] %v1258
        %1323 = vst [vmem:[#allocation2 + $0x70] sm:$0xff] %v1259
        %1324 = vst [vmem:[#allocation2 + $0x78] sm:$0xff] %v1260
        %1325 = vst [vmem:[#allocation2 + $0x80] sm:$0xff] %v1261
        %1326 = vst [vmem:[#allocation2 + $0x88] sm:$0xff] %v1262
        %1327 = vst [vmem:[#allocation2 + $0x90] sm:$0xff] %v1263
        %1328 = vst [vmem:[#allocation2 + $0x98] sm:$0xff] %v1264
        %1329 = vst [vmem:[#allocation2 + $0xa0] sm:$0xff] %v1265
        %1330 = vst [vmem:[#allocation2 + $0xa8] sm:$0xff] %v1266
        %1331 = vst [vmem:[#allocation2 + $0xb0] sm:$0xff] %v1267
        %1332 = vst [vmem:[#allocation2 + $0xb8] sm:$0xff] %v1268
        %1333 = vst [vmem:[#allocation2 + $0xc0] sm:$0xff] %v1269
        %1334 = vst [vmem:[#allocation2 + $0xc8] sm:$0xff] %v1270
        %1335 = vst [vmem:[#allocation2 + $0xd0] sm:$0xff] %v1271
        %1336 = vst [vmem:[#allocation2 + $0xd8] sm:$0xff] %v1272
        %1337 = vst [vmem:[#allocation2 + $0xe0] sm:$0xff] %v1273
        %1338 = vst [vmem:[#allocation2 + $0xe8] sm:$0xff] %v1274
        %1339 = vst [vmem:[#allocation2 + $0xf0] sm:$0xff] %v1275
        %1340 = vst [vmem:[#allocation2 + $0xf8] sm:$0xff] %v1276
        %1341 = vst [vmem:[#allocation2 + $0x100] sm:$0xff] %v1277
        %1342 = vst [vmem:[#allocation2 + $0x108] sm:$0xff] %v1278
        %1343 = vst [vmem:[#allocation2 + $0x110] sm:$0xff] %v1279
        %1344 = vst [vmem:[#allocation2 + $0x118] sm:$0xff] %v1280
        %1345 = vst [vmem:[#allocation2 + $0x120] sm:$0xff] %v1281
        %1346 = vst [vmem:[#allocation2 + $0x128] sm:$0xff] %v1282
        %1347 = vst [vmem:[#allocation2 + $0x130] sm:$0xff] %v1283
        %1348 = vst [vmem:[#allocation2 + $0x138] sm:$0xff] %v1284
        %1349 = vst [vmem:[#allocation2 + $0x140] sm:$0xff] %v1285
        %1350 = vst [vmem:[#allocation2 + $0x148] sm:$0xff] %v1286
        %1351 = vst [vmem:[#allocation2 + $0x150] sm:$0xff] %v1287
        %1352 = vst [vmem:[#allocation2 + $0x158] sm:$0xff] %v1288
        %1353 = vst [vmem:[#allocation2 + $0x160] sm:$0xff] %v1289
        %1354 = vst [vmem:[#allocation2 + $0x168] sm:$0xff] %v1290
        %1355 = vst [vmem:[#allocation2 + $0x170] sm:$0xff] %v1291
        %1356 = vst [vmem:[#allocation2 + $0x178] sm:$0xff] %v1292
        %1357 = vst [vmem:[#allocation2 + $0x180] sm:$0xff] %v1293
        %1358 = vst [vmem:[#allocation2 + $0x188] sm:$0xff] %v1294
        %1359 = vst [vmem:[#allocation2 + $0x190] sm:$0xff] %v1295
        %1360 = vst [vmem:[#allocation2 + $0x198] sm:$0xff] %v1296
        %1361 = vst [vmem:[#allocation2 + $0x1a0] sm:$0xff] %v1297
        %1362 = vst [vmem:[#allocation2 + $0x1a8] sm:$0xff] %v1298
        %1363 = vst [vmem:[#allocation2 + $0x1b0] sm:$0xff] %v1299
        %1364 = vst [vmem:[#allocation2 + $0x1b8] sm:$0xff] %v1300
        %1365 = vst [vmem:[#allocation2 + $0x1c0] sm:$0xff] %v1301
        %1366 = vst [vmem:[#allocation2 + $0x1c8] sm:$0xff] %v1302
        %1367 = vst [vmem:[#allocation2 + $0x1d0] sm:$0xff] %v1303
        %1368 = vst [vmem:[#allocation2 + $0x1d8] sm:$0xff] %v1304
        %1369 = vst [vmem:[#allocation2 + $0x1e0] sm:$0xff] %v1305
        %1370 = vst [vmem:[#allocation2 + $0x1e8] sm:$0xff] %v1306
        %1371 = vst [vmem:[#allocation2 + $0x1f0] sm:$0xff] %v1307
        %1372 = vst [vmem:[#allocation2 + $0x1f8] sm:$0xff] %v1308
        // Predicated region
        $region57: #{tpu_custom_call.1} parent=35 // pred_check
          %p1373 = pneg %p312
        $region58: #{tpu_custom_call.1} parent=35 // pred_check_branch
          %1375 = sbr.rel (%p1373) target = $region60
        $region59: #{tpu_custom_call.1} parent=35 // pred_region
          %v1376 = vld [vmem:[#allocation2] sm:$0xff]
          %v1377 = vld [vmem:[#allocation2 + $0x8] sm:$0xff]
          %v1378 = vld [vmem:[#allocation2 + $0x10] sm:$0xff]
          %v1379 = vld [vmem:[#allocation2 + $0x18] sm:$0xff]
          %v1380 = vld [vmem:[#allocation2 + $0x20] sm:$0xff]
          %v1381 = vld [vmem:[#allocation2 + $0x28] sm:$0xff]
          %v1382 = vld [vmem:[#allocation2 + $0x30] sm:$0xff]
          %v1383 = vld [vmem:[#allocation2 + $0x38] sm:$0xff]
          %v1384 = vld [vmem:[#allocation2 + $0x40] sm:$0xff]
          %v1385 = vld [vmem:[#allocation2 + $0x48] sm:$0xff]
          %v1386 = vld [vmem:[#allocation2 + $0x50] sm:$0xff]
          %v1387 = vld [vmem:[#allocation2 + $0x58] sm:$0xff]
          %v1388 = vld [vmem:[#allocation2 + $0x60] sm:$0xff]
          %v1389 = vld [vmem:[#allocation2 + $0x68] sm:$0xff]
          %v1390 = vld [vmem:[#allocation2 + $0x70] sm:$0xff]
          %v1391 = vld [vmem:[#allocation2 + $0x78] sm:$0xff]
          %v1392 = vld [vmem:[#allocation2 + $0x80] sm:$0xff]
          %v1393 = vld [vmem:[#allocation2 + $0x88] sm:$0xff]
          %v1394 = vld [vmem:[#allocation2 + $0x90] sm:$0xff]
          %v1395 = vld [vmem:[#allocation2 + $0x98] sm:$0xff]
          %v1396 = vld [vmem:[#allocation2 + $0xa0] sm:$0xff]
          %v1397 = vld [vmem:[#allocation2 + $0xa8] sm:$0xff]
          %v1398 = vld [vmem:[#allocation2 + $0xb0] sm:$0xff]
          %v1399 = vld [vmem:[#allocation2 + $0xb8] sm:$0xff]
          %v1400 = vld [vmem:[#allocation2 + $0xc0] sm:$0xff]
          %v1401 = vld [vmem:[#allocation2 + $0xc8] sm:$0xff]
          %v1402 = vld [vmem:[#allocation2 + $0xd0] sm:$0xff]
          %v1403 = vld [vmem:[#allocation2 + $0xd8] sm:$0xff]
          %v1404 = vld [vmem:[#allocation2 + $0xe0] sm:$0xff]
          %v1405 = vld [vmem:[#allocation2 + $0xe8] sm:$0xff]
          %v1406 = vld [vmem:[#allocation2 + $0xf0] sm:$0xff]
          %v1407 = vld [vmem:[#allocation2 + $0xf8] sm:$0xff]
          %v1408 = vld [vmem:[#allocation2 + $0x100] sm:$0xff]
          %v1409 = vld [vmem:[#allocation2 + $0x108] sm:$0xff]
          %v1410 = vld [vmem:[#allocation2 + $0x110] sm:$0xff]
          %v1411 = vld [vmem:[#allocation2 + $0x118] sm:$0xff]
          %v1412 = vld [vmem:[#allocation2 + $0x120] sm:$0xff]
          %v1413 = vld [vmem:[#allocation2 + $0x128] sm:$0xff]
          %v1414 = vld [vmem:[#allocation2 + $0x130] sm:$0xff]
          %v1415 = vld [vmem:[#allocation2 + $0x138] sm:$0xff]
          %v1416 = vld [vmem:[#allocation2 + $0x140] sm:$0xff]
          %v1417 = vld [vmem:[#allocation2 + $0x148] sm:$0xff]
          %v1418 = vld [vmem:[#allocation2 + $0x150] sm:$0xff]
          %v1419 = vld [vmem:[#allocation2 + $0x158] sm:$0xff]
          %v1420 = vld [vmem:[#allocation2 + $0x160] sm:$0xff]
          %v1421 = vld [vmem:[#allocation2 + $0x168] sm:$0xff]
          %v1422 = vld [vmem:[#allocation2 + $0x170] sm:$0xff]
          %v1423 = vld [vmem:[#allocation2 + $0x178] sm:$0xff]
          %v1424 = vld [vmem:[#allocation2 + $0x180] sm:$0xff]
          %v1425 = vld [vmem:[#allocation2 + $0x188] sm:$0xff]
          %v1426 = vld [vmem:[#allocation2 + $0x190] sm:$0xff]
          %v1427 = vld [vmem:[#allocation2 + $0x198] sm:$0xff]
          %v1428 = vld [vmem:[#allocation2 + $0x1a0] sm:$0xff]
          %v1429 = vld [vmem:[#allocation2 + $0x1a8] sm:$0xff]
          %v1430 = vld [vmem:[#allocation2 + $0x1b0] sm:$0xff]
          %v1431 = vld [vmem:[#allocation2 + $0x1b8] sm:$0xff]
          %v1432 = vld [vmem:[#allocation2 + $0x1c0] sm:$0xff]
          %v1433 = vld [vmem:[#allocation2 + $0x1c8] sm:$0xff]
          %v1434 = vld [vmem:[#allocation2 + $0x1d0] sm:$0xff]
          %v1435 = vld [vmem:[#allocation2 + $0x1d8] sm:$0xff]
          %v1436 = vld [vmem:[#allocation2 + $0x1e0] sm:$0xff]
          %v1437 = vld [vmem:[#allocation2 + $0x1e8] sm:$0xff]
          %v1438 = vld [vmem:[#allocation2 + $0x1f0] sm:$0xff]
          %v1439 = vld [vmem:[#allocation2 + $0x1f8] sm:$0xff]
          %v1440 = vld [vmem:[#allocation8] sm:$0x1]
          %v1442 = vlaneseq
          %v1443 = vshrl.u32 %v1442, 7
          %v1444 = vsub.s32 0, %v1443
          %v1445 = vrot.slane %v1440, %v1444
          %v1447 = vmul.f32 %v1376, %v1445
          %v1448 = vmul.f32 %v1377, %v1445
          %v1449 = vmul.f32 %v1378, %v1445
          %v1450 = vmul.f32 %v1379, %v1445
          %v1451 = vmul.f32 %v1380, %v1445
          %v1452 = vmul.f32 %v1381, %v1445
          %v1453 = vmul.f32 %v1382, %v1445
          %v1454 = vmul.f32 %v1383, %v1445
          %v1455 = vmul.f32 %v1384, %v1445
          %v1456 = vmul.f32 %v1385, %v1445
          %v1457 = vmul.f32 %v1386, %v1445
          %v1458 = vmul.f32 %v1387, %v1445
          %v1459 = vmul.f32 %v1388, %v1445
          %v1460 = vmul.f32 %v1389, %v1445
          %v1461 = vmul.f32 %v1390, %v1445
          %v1462 = vmul.f32 %v1391, %v1445
          %v1463 = vmul.f32 %v1392, %v1445
          %v1464 = vmul.f32 %v1393, %v1445
          %v1465 = vmul.f32 %v1394, %v1445
          %v1466 = vmul.f32 %v1395, %v1445
          %v1467 = vmul.f32 %v1396, %v1445
          %v1468 = vmul.f32 %v1397, %v1445
          %v1469 = vmul.f32 %v1398, %v1445
          %v1470 = vmul.f32 %v1399, %v1445
          %v1471 = vmul.f32 %v1400, %v1445
          %v1472 = vmul.f32 %v1401, %v1445
          %v1473 = vmul.f32 %v1402, %v1445
          %v1474 = vmul.f32 %v1403, %v1445
          %v1475 = vmul.f32 %v1404, %v1445
          %v1476 = vmul.f32 %v1405, %v1445
          %v1477 = vmul.f32 %v1406, %v1445
          %v1478 = vmul.f32 %v1407, %v1445
          %v1479 = vmul.f32 %v1408, %v1445
          %v1480 = vmul.f32 %v1409, %v1445
          %v1481 = vmul.f32 %v1410, %v1445
          %v1482 = vmul.f32 %v1411, %v1445
          %v1483 = vmul.f32 %v1412, %v1445
          %v1484 = vmul.f32 %v1413, %v1445
          %v1485 = vmul.f32 %v1414, %v1445
          %v1486 = vmul.f32 %v1415, %v1445
          %v1487 = vmul.f32 %v1416, %v1445
          %v1488 = vmul.f32 %v1417, %v1445
          %v1489 = vmul.f32 %v1418, %v1445
          %v1490 = vmul.f32 %v1419, %v1445
          %v1491 = vmul.f32 %v1420, %v1445
          %v1492 = vmul.f32 %v1421, %v1445
          %v1493 = vmul.f32 %v1422, %v1445
          %v1494 = vmul.f32 %v1423, %v1445
          %v1495 = vmul.f32 %v1424, %v1445
          %v1496 = vmul.f32 %v1425, %v1445
          %v1497 = vmul.f32 %v1426, %v1445
          %v1498 = vmul.f32 %v1427, %v1445
          %v1499 = vmul.f32 %v1428, %v1445
          %v1500 = vmul.f32 %v1429, %v1445
          %v1501 = vmul.f32 %v1430, %v1445
          %v1502 = vmul.f32 %v1431, %v1445
          %v1503 = vmul.f32 %v1432, %v1445
          %v1504 = vmul.f32 %v1433, %v1445
          %v1505 = vmul.f32 %v1434, %v1445
          %v1506 = vmul.f32 %v1435, %v1445
          %v1507 = vmul.f32 %v1436, %v1445
          %v1508 = vmul.f32 %v1437, %v1445
          %v1509 = vmul.f32 %v1438, %v1445
          %v1510 = vmul.f32 %v1439, %v1445
          %v1511 = vld [vmem:[#allocation9] sm:$0x1]
          %v1513 = vlaneseq
          %v1514 = vshrl.u32 %v1513, 7
          %v1515 = vsub.s32 0, %v1514
          %v1516 = vrot.slane %v1511, %v1515
          %v1518 = vadd.f32 %v1447, %v1516
          %v1519 = vadd.f32 %v1448, %v1516
          %v1520 = vadd.f32 %v1449, %v1516
          %v1521 = vadd.f32 %v1450, %v1516
          %v1522 = vadd.f32 %v1451, %v1516
          %v1523 = vadd.f32 %v1452, %v1516
          %v1524 = vadd.f32 %v1453, %v1516
          %v1525 = vadd.f32 %v1454, %v1516
          %v1526 = vadd.f32 %v1455, %v1516
          %v1527 = vadd.f32 %v1456, %v1516
          %v1528 = vadd.f32 %v1457, %v1516
          %v1529 = vadd.f32 %v1458, %v1516
          %v1530 = vadd.f32 %v1459, %v1516
          %v1531 = vadd.f32 %v1460, %v1516
          %v1532 = vadd.f32 %v1461, %v1516
          %v1533 = vadd.f32 %v1462, %v1516
          %v1534 = vadd.f32 %v1463, %v1516
          %v1535 = vadd.f32 %v1464, %v1516
          %v1536 = vadd.f32 %v1465, %v1516
          %v1537 = vadd.f32 %v1466, %v1516
          %v1538 = vadd.f32 %v1467, %v1516
          %v1539 = vadd.f32 %v1468, %v1516
          %v1540 = vadd.f32 %v1469, %v1516
          %v1541 = vadd.f32 %v1470, %v1516
          %v1542 = vadd.f32 %v1471, %v1516
          %v1543 = vadd.f32 %v1472, %v1516
          %v1544 = vadd.f32 %v1473, %v1516
          %v1545 = vadd.f32 %v1474, %v1516
          %v1546 = vadd.f32 %v1475, %v1516
          %v1547 = vadd.f32 %v1476, %v1516
          %v1548 = vadd.f32 %v1477, %v1516
          %v1549 = vadd.f32 %v1478, %v1516
          %v1550 = vadd.f32 %v1479, %v1516
          %v1551 = vadd.f32 %v1480, %v1516
          %v1552 = vadd.f32 %v1481, %v1516
          %v1553 = vadd.f32 %v1482, %v1516
          %v1554 = vadd.f32 %v1483, %v1516
          %v1555 = vadd.f32 %v1484, %v1516
          %v1556 = vadd.f32 %v1485, %v1516
          %v1557 = vadd.f32 %v1486, %v1516
          %v1558 = vadd.f32 %v1487, %v1516
          %v1559 = vadd.f32 %v1488, %v1516
          %v1560 = vadd.f32 %v1489, %v1516
          %v1561 = vadd.f32 %v1490, %v1516
          %v1562 = vadd.f32 %v1491, %v1516
          %v1563 = vadd.f32 %v1492, %v1516
          %v1564 = vadd.f32 %v1493, %v1516
          %v1565 = vadd.f32 %v1494, %v1516
          %v1566 = vadd.f32 %v1495, %v1516
          %v1567 = vadd.f32 %v1496, %v1516
          %v1568 = vadd.f32 %v1497, %v1516
          %v1569 = vadd.f32 %v1498, %v1516
          %v1570 = vadd.f32 %v1499, %v1516
          %v1571 = vadd.f32 %v1500, %v1516
          %v1572 = vadd.f32 %v1501, %v1516
          %v1573 = vadd.f32 %v1502, %v1516
          %v1574 = vadd.f32 %v1503, %v1516
          %v1575 = vadd.f32 %v1504, %v1516
          %v1576 = vadd.f32 %v1505, %v1516
          %v1577 = vadd.f32 %v1506, %v1516
          %v1578 = vadd.f32 %v1507, %v1516
          %v1579 = vadd.f32 %v1508, %v1516
          %v1580 = vadd.f32 %v1509, %v1516
          %v1581 = vadd.f32 %v1510, %v1516
          %v1582 = vmax.f32 %v1518, 0.0
          %v1583 = vmax.f32 %v1519, 0.0
          %v1584 = vmax.f32 %v1520, 0.0
          %v1585 = vmax.f32 %v1521, 0.0
          %v1586 = vmax.f32 %v1522, 0.0
          %v1587 = vmax.f32 %v1523, 0.0
          %v1588 = vmax.f32 %v1524, 0.0
          %v1589 = vmax.f32 %v1525, 0.0
          %v1590 = vmax.f32 %v1526, 0.0
          %v1591 = vmax.f32 %v1527, 0.0
          %v1592 = vmax.f32 %v1528, 0.0
          %v1593 = vmax.f32 %v1529, 0.0
          %v1594 = vmax.f32 %v1530, 0.0
          %v1595 = vmax.f32 %v1531, 0.0
          %v1596 = vmax.f32 %v1532, 0.0
          %v1597 = vmax.f32 %v1533, 0.0
          %v1598 = vmax.f32 %v1534, 0.0
          %v1599 = vmax.f32 %v1535, 0.0
          %v1600 = vmax.f32 %v1536, 0.0
          %v1601 = vmax.f32 %v1537, 0.0
          %v1602 = vmax.f32 %v1538, 0.0
          %v1603 = vmax.f32 %v1539, 0.0
          %v1604 = vmax.f32 %v1540, 0.0
          %v1605 = vmax.f32 %v1541, 0.0
          %v1606 = vmax.f32 %v1542, 0.0
          %v1607 = vmax.f32 %v1543, 0.0
          %v1608 = vmax.f32 %v1544, 0.0
          %v1609 = vmax.f32 %v1545, 0.0
          %v1610 = vmax.f32 %v1546, 0.0
          %v1611 = vmax.f32 %v1547, 0.0
          %v1612 = vmax.f32 %v1548, 0.0
          %v1613 = vmax.f32 %v1549, 0.0
          %v1614 = vmax.f32 %v1550, 0.0
          %v1615 = vmax.f32 %v1551, 0.0
          %v1616 = vmax.f32 %v1552, 0.0
          %v1617 = vmax.f32 %v1553, 0.0
          %v1618 = vmax.f32 %v1554, 0.0
          %v1619 = vmax.f32 %v1555, 0.0
          %v1620 = vmax.f32 %v1556, 0.0
          %v1621 = vmax.f32 %v1557, 0.0
          %v1622 = vmax.f32 %v1558, 0.0
          %v1623 = vmax.f32 %v1559, 0.0
          %v1624 = vmax.f32 %v1560, 0.0
          %v1625 = vmax.f32 %v1561, 0.0
          %v1626 = vmax.f32 %v1562, 0.0
          %v1627 = vmax.f32 %v1563, 0.0
          %v1628 = vmax.f32 %v1564, 0.0
          %v1629 = vmax.f32 %v1565, 0.0
          %v1630 = vmax.f32 %v1566, 0.0
          %v1631 = vmax.f32 %v1567, 0.0
          %v1632 = vmax.f32 %v1568, 0.0
          %v1633 = vmax.f32 %v1569, 0.0
          %v1634 = vmax.f32 %v1570, 0.0
          %v1635 = vmax.f32 %v1571, 0.0
          %v1636 = vmax.f32 %v1572, 0.0
          %v1637 = vmax.f32 %v1573, 0.0
          %v1638 = vmax.f32 %v1574, 0.0
          %v1639 = vmax.f32 %v1575, 0.0
          %v1640 = vmax.f32 %v1576, 0.0
          %v1641 = vmax.f32 %v1577, 0.0
          %v1642 = vmax.f32 %v1578, 0.0
          %v1643 = vmax.f32 %v1579, 0.0
          %v1644 = vmax.f32 %v1580, 0.0
          %v1645 = vmax.f32 %v1581, 0.0
          %v1646 = vpack.c.bf16 %v1583, %v1582
          %v1647 = vpack.c.bf16 %v1585, %v1584
          %v1648 = vpack.c.bf16 %v1587, %v1586
          %v1649 = vpack.c.bf16 %v1589, %v1588
          %v1650 = vpack.c.bf16 %v1591, %v1590
          %v1651 = vpack.c.bf16 %v1593, %v1592
          %v1652 = vpack.c.bf16 %v1595, %v1594
          %v1653 = vpack.c.bf16 %v1597, %v1596
          %v1654 = vpack.c.bf16 %v1599, %v1598
          %v1655 = vpack.c.bf16 %v1601, %v1600
          %v1656 = vpack.c.bf16 %v1603, %v1602
          %v1657 = vpack.c.bf16 %v1605, %v1604
          %v1658 = vpack.c.bf16 %v1607, %v1606
          %v1659 = vpack.c.bf16 %v1609, %v1608
          %v1660 = vpack.c.bf16 %v1611, %v1610
          %v1661 = vpack.c.bf16 %v1613, %v1612
          %v1662 = vpack.c.bf16 %v1615, %v1614
          %v1663 = vpack.c.bf16 %v1617, %v1616
          %v1664 = vpack.c.bf16 %v1619, %v1618
          %v1665 = vpack.c.bf16 %v1621, %v1620
          %v1666 = vpack.c.bf16 %v1623, %v1622
          %v1667 = vpack.c.bf16 %v1625, %v1624
          %v1668 = vpack.c.bf16 %v1627, %v1626
          %v1669 = vpack.c.bf16 %v1629, %v1628
          %v1670 = vpack.c.bf16 %v1631, %v1630
          %v1671 = vpack.c.bf16 %v1633, %v1632
          %v1672 = vpack.c.bf16 %v1635, %v1634
          %v1673 = vpack.c.bf16 %v1637, %v1636
          %v1674 = vpack.c.bf16 %v1639, %v1638
          %v1675 = vpack.c.bf16 %v1641, %v1640
          %v1676 = vpack.c.bf16 %v1643, %v1642
          %v1677 = vpack.c.bf16 %v1645, %v1644
          %v1710 = vunpack.c.l.b16 %v1646
          %v1711 = vunpack.c.h.b16 %v1646
          %v1712 = vunpack.c.l.b16 %v1647
          %v1713 = vunpack.c.h.b16 %v1647
          %v1714 = vunpack.c.l.b16 %v1648
          %v1715 = vunpack.c.h.b16 %v1648
          %v1716 = vunpack.c.l.b16 %v1649
          %v1717 = vunpack.c.h.b16 %v1649
          %v1718 = vunpack.c.l.b16 %v1650
          %v1719 = vunpack.c.h.b16 %v1650
          %v1720 = vunpack.c.l.b16 %v1651
          %v1721 = vunpack.c.h.b16 %v1651
          %v1722 = vunpack.c.l.b16 %v1652
          %v1723 = vunpack.c.h.b16 %v1652
          %v1724 = vunpack.c.l.b16 %v1653
          %v1725 = vunpack.c.h.b16 %v1653
          %v1726 = vunpack.c.l.b16 %v1654
          %v1727 = vunpack.c.h.b16 %v1654
          %v1728 = vunpack.c.l.b16 %v1655
          %v1729 = vunpack.c.h.b16 %v1655
          %v1730 = vunpack.c.l.b16 %v1656
          %v1731 = vunpack.c.h.b16 %v1656
          %v1732 = vunpack.c.l.b16 %v1657
          %v1733 = vunpack.c.h.b16 %v1657
          %v1734 = vunpack.c.l.b16 %v1658
          %v1735 = vunpack.c.h.b16 %v1658
          %v1736 = vunpack.c.l.b16 %v1659
          %v1737 = vunpack.c.h.b16 %v1659
          %v1738 = vunpack.c.l.b16 %v1660
          %v1739 = vunpack.c.h.b16 %v1660
          %v1740 = vunpack.c.l.b16 %v1661
          %v1741 = vunpack.c.h.b16 %v1661
          %v1742 = vunpack.c.l.b16 %v1662
          %v1743 = vunpack.c.h.b16 %v1662
          %v1744 = vunpack.c.l.b16 %v1663
          %v1745 = vunpack.c.h.b16 %v1663
          %v1746 = vunpack.c.l.b16 %v1664
          %v1747 = vunpack.c.h.b16 %v1664
          %v1748 = vunpack.c.l.b16 %v1665
          %v1749 = vunpack.c.h.b16 %v1665
          %v1750 = vunpack.c.l.b16 %v1666
          %v1751 = vunpack.c.h.b16 %v1666
          %v1752 = vunpack.c.l.b16 %v1667
          %v1753 = vunpack.c.h.b16 %v1667
          %v1754 = vunpack.c.l.b16 %v1668
          %v1755 = vunpack.c.h.b16 %v1668
          %v1756 = vunpack.c.l.b16 %v1669
          %v1757 = vunpack.c.h.b16 %v1669
          %v1758 = vunpack.c.l.b16 %v1670
          %v1759 = vunpack.c.h.b16 %v1670
          %v1760 = vunpack.c.l.b16 %v1671
          %v1761 = vunpack.c.h.b16 %v1671
          %v1762 = vunpack.c.l.b16 %v1672
          %v1763 = vunpack.c.h.b16 %v1672
          %v1764 = vunpack.c.l.b16 %v1673
          %v1765 = vunpack.c.h.b16 %v1673
          %v1766 = vunpack.c.l.b16 %v1674
          %v1767 = vunpack.c.h.b16 %v1674
          %v1768 = vunpack.c.l.b16 %v1675
          %v1769 = vunpack.c.h.b16 %v1675
          %v1770 = vunpack.c.l.b16 %v1676
          %v1771 = vunpack.c.h.b16 %v1676
          %v1772 = vunpack.c.l.b16 %v1677
          %v1773 = vunpack.c.h.b16 %v1677
          %v1774 = vpack.c.b16 %v1710, %v1710
          %v1775 = vpack.c.b16 %v1711, %v1711
          %v1776 = vpack.c.b16 %v1712, %v1712
          %v1777 = vpack.c.b16 %v1713, %v1713
          %v1778 = vpack.c.b16 %v1714, %v1714
          %v1779 = vpack.c.b16 %v1715, %v1715
          %v1780 = vpack.c.b16 %v1716, %v1716
          %v1781 = vpack.c.b16 %v1717, %v1717
          %v1782 = vpack.c.b16 %v1718, %v1718
          %v1783 = vpack.c.b16 %v1719, %v1719
          %v1784 = vpack.c.b16 %v1720, %v1720
          %v1785 = vpack.c.b16 %v1721, %v1721
          %v1786 = vpack.c.b16 %v1722, %v1722
          %v1787 = vpack.c.b16 %v1723, %v1723
          %v1788 = vpack.c.b16 %v1724, %v1724
          %v1789 = vpack.c.b16 %v1725, %v1725
          %v1790 = vpack.c.b16 %v1726, %v1726
          %v1791 = vpack.c.b16 %v1727, %v1727
          %v1792 = vpack.c.b16 %v1728, %v1728
          %v1793 = vpack.c.b16 %v1729, %v1729
          %v1794 = vpack.c.b16 %v1730, %v1730
          %v1795 = vpack.c.b16 %v1731, %v1731
          %v1796 = vpack.c.b16 %v1732, %v1732
          %v1797 = vpack.c.b16 %v1733, %v1733
          %v1798 = vpack.c.b16 %v1734, %v1734
          %v1799 = vpack.c.b16 %v1735, %v1735
          %v1800 = vpack.c.b16 %v1736, %v1736
          %v1801 = vpack.c.b16 %v1737, %v1737
          %v1802 = vpack.c.b16 %v1738, %v1738
          %v1803 = vpack.c.b16 %v1739, %v1739
          %v1804 = vpack.c.b16 %v1740, %v1740
          %v1805 = vpack.c.b16 %v1741, %v1741
          %v1806 = vpack.c.b16 %v1742, %v1742
          %v1807 = vpack.c.b16 %v1743, %v1743
          %v1808 = vpack.c.b16 %v1744, %v1744
          %v1809 = vpack.c.b16 %v1745, %v1745
          %v1810 = vpack.c.b16 %v1746, %v1746
          %v1811 = vpack.c.b16 %v1747, %v1747
          %v1812 = vpack.c.b16 %v1748, %v1748
          %v1813 = vpack.c.b16 %v1749, %v1749
          %v1814 = vpack.c.b16 %v1750, %v1750
          %v1815 = vpack.c.b16 %v1751, %v1751
          %v1816 = vpack.c.b16 %v1752, %v1752
          %v1817 = vpack.c.b16 %v1753, %v1753
          %v1818 = vpack.c.b16 %v1754, %v1754
          %v1819 = vpack.c.b16 %v1755, %v1755
          %v1820 = vpack.c.b16 %v1756, %v1756
          %v1821 = vpack.c.b16 %v1757, %v1757
          %v1822 = vpack.c.b16 %v1758, %v1758
          %v1823 = vpack.c.b16 %v1759, %v1759
          %v1824 = vpack.c.b16 %v1760, %v1760
          %v1825 = vpack.c.b16 %v1761, %v1761
          %v1826 = vpack.c.b16 %v1762, %v1762
          %v1827 = vpack.c.b16 %v1763, %v1763
          %v1828 = vpack.c.b16 %v1764, %v1764
          %v1829 = vpack.c.b16 %v1765, %v1765
          %v1830 = vpack.c.b16 %v1766, %v1766
          %v1831 = vpack.c.b16 %v1767, %v1767
          %v1832 = vpack.c.b16 %v1768, %v1768
          %v1833 = vpack.c.b16 %v1769, %v1769
          %v1834 = vpack.c.b16 %v1770, %v1770
          %v1835 = vpack.c.b16 %v1771, %v1771
          %v1836 = vpack.c.b16 %v1772, %v1772
          %v1837 = vpack.c.b16 %v1773, %v1773
          %1902 = vst [vmem:[%s306] sm:$0xf] %v1774
          %1903 = vst [vmem:[%s306 + $0x4] sm:$0xf] %v1775
          %1904 = vst [vmem:[%s306 + $0x8] sm:$0xf] %v1776
          %1905 = vst [vmem:[%s306 + $0xc] sm:$0xf] %v1777
          %1906 = vst [vmem:[%s306 + $0x10] sm:$0xf] %v1778
          %1907 = vst [vmem:[%s306 + $0x14] sm:$0xf] %v1779
          %1908 = vst [vmem:[%s306 + $0x18] sm:$0xf] %v1780
          %1909 = vst [vmem:[%s306 + $0x1c] sm:$0xf] %v1781
          %1910 = vst [vmem:[%s306 + $0x20] sm:$0xf] %v1782
          %1911 = vst [vmem:[%s306 + $0x24] sm:$0xf] %v1783
          %1912 = vst [vmem:[%s306 + $0x28] sm:$0xf] %v1784
          %1913 = vst [vmem:[%s306 + $0x2c] sm:$0xf] %v1785
          %1914 = vst [vmem:[%s306 + $0x30] sm:$0xf] %v1786
          %1915 = vst [vmem:[%s306 + $0x34] sm:$0xf] %v1787
          %1916 = vst [vmem:[%s306 + $0x38] sm:$0xf] %v1788
          %1917 = vst [vmem:[%s306 + $0x3c] sm:$0xf] %v1789
          %1918 = vst [vmem:[%s306 + $0x40] sm:$0xf] %v1790
          %1919 = vst [vmem:[%s306 + $0x44] sm:$0xf] %v1791
          %1920 = vst [vmem:[%s306 + $0x48] sm:$0xf] %v1792
          %1921 = vst [vmem:[%s306 + $0x4c] sm:$0xf] %v1793
          %1922 = vst [vmem:[%s306 + $0x50] sm:$0xf] %v1794
          %1923 = vst [vmem:[%s306 + $0x54] sm:$0xf] %v1795
          %1924 = vst [vmem:[%s306 + $0x58] sm:$0xf] %v1796
          %1925 = vst [vmem:[%s306 + $0x5c] sm:$0xf] %v1797
          %1926 = vst [vmem:[%s306 + $0x60] sm:$0xf] %v1798
          %1927 = vst [vmem:[%s306 + $0x64] sm:$0xf] %v1799
          %1928 = vst [vmem:[%s306 + $0x68] sm:$0xf] %v1800
          %1929 = vst [vmem:[%s306 + $0x6c] sm:$0xf] %v1801
          %1930 = vst [vmem:[%s306 + $0x70] sm:$0xf] %v1802
          %1931 = vst [vmem:[%s306 + $0x74] sm:$0xf] %v1803
          %1932 = vst [vmem:[%s306 + $0x78] sm:$0xf] %v1804
          %1933 = vst [vmem:[%s306 + $0x7c] sm:$0xf] %v1805
          %1934 = vst [vmem:[%s306 + $0x80] sm:$0xf] %v1806
          %1935 = vst [vmem:[%s306 + $0x84] sm:$0xf] %v1807
          %1936 = vst [vmem:[%s306 + $0x88] sm:$0xf] %v1808
          %1937 = vst [vmem:[%s306 + $0x8c] sm:$0xf] %v1809
          %1938 = vst [vmem:[%s306 + $0x90] sm:$0xf] %v1810
          %1939 = vst [vmem:[%s306 + $0x94] sm:$0xf] %v1811
          %1940 = vst [vmem:[%s306 + $0x98] sm:$0xf] %v1812
          %1941 = vst [vmem:[%s306 + $0x9c] sm:$0xf] %v1813
          %1942 = vst [vmem:[%s306 + $0xa0] sm:$0xf] %v1814
          %1943 = vst [vmem:[%s306 + $0xa4] sm:$0xf] %v1815
          %1944 = vst [vmem:[%s306 + $0xa8] sm:$0xf] %v1816
          %1945 = vst [vmem:[%s306 + $0xac] sm:$0xf] %v1817
          %1946 = vst [vmem:[%s306 + $0xb0] sm:$0xf] %v1818
          %1947 = vst [vmem:[%s306 + $0xb4] sm:$0xf] %v1819
          %1948 = vst [vmem:[%s306 + $0xb8] sm:$0xf] %v1820
          %1949 = vst [vmem:[%s306 + $0xbc] sm:$0xf] %v1821
          %1950 = vst [vmem:[%s306 + $0xc0] sm:$0xf] %v1822
          %1951 = vst [vmem:[%s306 + $0xc4] sm:$0xf] %v1823
          %1952 = vst [vmem:[%s306 + $0xc8] sm:$0xf] %v1824
          %1953 = vst [vmem:[%s306 + $0xcc] sm:$0xf] %v1825
          %1954 = vst [vmem:[%s306 + $0xd0] sm:$0xf] %v1826
          %1955 = vst [vmem:[%s306 + $0xd4] sm:$0xf] %v1827
          %1956 = vst [vmem:[%s306 + $0xd8] sm:$0xf] %v1828
          %1957 = vst [vmem:[%s306 + $0xdc] sm:$0xf] %v1829
          %1958 = vst [vmem:[%s306 + $0xe0] sm:$0xf] %v1830
          %1959 = vst [vmem:[%s306 + $0xe4] sm:$0xf] %v1831
          %1960 = vst [vmem:[%s306 + $0xe8] sm:$0xf] %v1832
          %1961 = vst [vmem:[%s306 + $0xec] sm:$0xf] %v1833
          %1962 = vst [vmem:[%s306 + $0xf0] sm:$0xf] %v1834
          %1963 = vst [vmem:[%s306 + $0xf4] sm:$0xf] %v1835
          %1964 = vst [vmem:[%s306 + $0xf8] sm:$0xf] %v1836
          %1965 = vst [vmem:[%s306 + $0xfc] sm:$0xf] %v1837
        $region60: #{tpu_custom_call.1} parent=35 // pred_fallthru
          _
        %s1966 = sand.u32 %s160, 1
        %s1967 = scalar_lea.sflag [#allocation5], %s1966
        %s1968 = sand.u32 %s160, 1
        %s1969 = smul.addr %s1968, 256
        %s1970 = scalar_lea.vmem [#allocation11], %s1969
        // Predicated region
        $region61: #{tpu_custom_call.1} parent=35 // pred_check
          %p1971 = pneg %p170
        $region62: #{tpu_custom_call.1} parent=35 // pred_check_branch
          %1973 = sbr.rel (%p1971) target = $region64
        $region63: #{tpu_custom_call.1} parent=35 // pred_region
          %s1974 = smul.u32 64, %s28
          %s1976 = ssub.s32 4096, 4096
          %1977 = vsyncadd %s1967, %s1976
          %s1978 = sadd.s32 %s29, %s1974
          %s1979 = smul.addr %s1978, 64
          %s1980 = scalar_lea.hbm %s4, %s1979
          %s1981 = sshll.u32 %s1970, 4
          %s1982 = int_to_ptr.vmem [resolvable:$true] %s1981
          %1987 = dma.vmem_to_hbm [thread:$0]  %s1982, 4096, %s1980, %s1967, 64, 64, 4
        $region64: #{tpu_custom_call.1} parent=35 // pred_fallthru
          _
      $region36: #{tpu_custom_call.1} parent=5 // pred_fallthru
        _
      %p1988 = scmp.le.s32.totalorder 2, %s18
      // Predicated region
      $region65: #{tpu_custom_call.1} parent=5 // pred_check
        %p1989 = pneg %p1988
      $region66: #{tpu_custom_call.1} parent=5 // pred_check_branch
        %1991 = sbr.rel (%p1989) target = $region68
      $region67: #{tpu_custom_call.1} parent=5 // pred_region
        %s1992 = ssub.s32 %s18, 2
        // Predicated region
        $region69: #{tpu_custom_call.1} parent=67 // pred_check
          %p1993 = pneg %p176
        $region70: #{tpu_custom_call.1} parent=67 // pred_check_branch
          %1995 = sbr.rel (%p1993) target = $region72
        $region71: #{tpu_custom_call.1} parent=67 // pred_region
          %s1996 = sand.u32 %s161, 1
          %s1997 = scalar_lea.sflag [#allocation5], %s1996
          %s1998 = sand.u32 %s161, 1
          %s1999 = smul.addr %s1998, 256
          %s2000 = scalar_lea.vmem [#allocation11], %s1999
          %2001 = dma.done %s1997, 4096
        $region72: #{tpu_custom_call.1} parent=67 // pred_fallthru
          _
      $region68: #{tpu_custom_call.1} parent=5 // pred_fallthru
        _
    $region6: #{tpu_custom_call.1} parent=1 // loop_footer
      %s22 = sadd.s32 1, %s18
    $region7: #{tpu_custom_call.1} parent=1 // loop_footer_branch
      %17 = sbr.rel target = $region3
    $region8: #{tpu_custom_call.1} parent=1 // loop_exit
      _
    %2002 = vsyncpa [#allocation4], 1
    %s2003 = scalar_lea.sflag [#allocation4], 1
    %2004 = vsyncpa %s2003, 1
    %2005 = vsyncpa [#allocation7], 1
    %2006 = vsyncpa [#allocation10], 1
    %2007 = vsyncpa [#allocation5], 1
    %s2008 = scalar_lea.sflag [#allocation5], 1
    %2009 = vsyncpa %s2008, 1

</llo_original>
